<compile_context>
chip_gen: v5e
topology: v5e:2x2
jax: 0.10.0
libtpu: 0.0.40
codegen_flags: <defaults>
</compile_context>

<pallas_src>
import jax
import jax.numpy as jnp
from jax import lax
from jax.experimental import pallas as pl
from jax.experimental.pallas import tpu as pltpu


def _pick_row_block(HO, WO):
    """Smallest even divisor R of HO with R*WO >= 128 (MXU M dim); fallback HO."""
    for R in range(2, HO + 1, 2):
        if HO % R == 0 and R * WO >= 128:
            return R
    return HO


def _make_stem_kernel(WO, PW, R, Cout):
    """Fused conv(7x7,s2 as 4x4,s1 on s2d input) + BN-shift + ReLU + maxpool(3x3,s2,p1)."""
    RP = R // 2  # pool rows produced per row-block

    def kernel(xs_ref, w_ref, shift_ref, out_ref, zb_ref, cmx_ref):
        # xs_ref:    (1, Hs, Ws, 16)   space-to-depth(2) padded input, bf16 (whole image)
        # w_ref:     (256, 64)         tap-major flattened weights, BN scale folded, bf16
        # shift_ref: (1, 64)           folded BN shift, f32
        # out_ref:   (1, R/2, PW, 64)  pooled output rows for this row-block, f32
        # zb_ref:    (R, WO+1, 64)     scratch: ReLU'd conv rows with a zero left-pad col
        # cmx_ref:   (R+1, PW, 64)     scratch: row 0 = carry (prev block's last
        #                              column-pooled conv row), rows 1..R = this block
        rb = pl.program_id(1)
        base = rb * R                                           # first conv row of block

        # Pool-row carry = conv row -1 (zero padding; safe post-ReLU). Reset per image.
        @pl.when(rb == 0)
        def _():
            cmx_ref[0] = jnp.zeros((PW, Cout), jnp.float32)

        # ---- im2col for this row-block: (R*WO, 256) bf16 from 16 shifted windows ----
        rows = [xs_ref[0, base + k, :, :] for k in range(R + 3)]     # (Ws, 16) bf16 each
        slabs = []
        for r in range(R):                                           # static unroll
            pieces = []
            for dh in range(4):
                row = rows[r + dh]
                for dw in range(4):
                    pieces.append(row[dw:dw + WO, :])                # (WO, 16)
            slabs.append(jnp.concatenate(pieces, axis=-1))           # (WO, 256)
        lhs = jnp.concatenate(slabs, axis=0)                         # (R*WO, 256)

        # ---- one MXU matmul (BN scale already in w), f32 acc; shift + ReLU in f32 ----
        acc = jnp.dot(lhs, w_ref[...], preferred_element_type=jnp.float32)  # (R*WO, 64)
        z = jnp.maximum(acc + shift_ref[...], 0.0)                   # (R*WO, 64) f32

        # ---- fused 3x3/s2 max pool, pass 1: columns (3 stride-2 taps, zero left pad) ----
        zb_ref[:, 0, :] = jnp.zeros((R, Cout), jnp.float32)          # left pad column
        zb_ref[:, pl.ds(1, WO), :] = z.reshape(R, WO, Cout)
        cm = jnp.maximum(
            jnp.maximum(zb_ref[:, pl.ds(0, PW, stride=2), :],        # conv col 2q-1
                        zb_ref[:, pl.ds(1, PW, stride=2), :]),       # conv col 2q
            zb_ref[:, pl.ds(2, PW, stride=2), :])                    # conv col 2q+1

        # ---- pass 2: rows (3 stride-2 taps; cmx row 0 holds the carry) ----
        cmx_ref[pl.ds(1, R), :, :] = cm
        pooled = jnp.maximum(
            jnp.maximum(cmx_ref[pl.ds(0, RP, stride=2), :, :],       # conv row 2p-1
                        cmx_ref[pl.ds(1, RP, stride=2), :, :]),      # conv row 2p
            cmx_ref[pl.ds(2, RP, stride=2), :, :])                   # conv row 2p+1
        out_ref[0] = pooled
        cmx_ref[0] = cmx_ref[R]                                      # carry for next block

    return kernel


def stem_forward(x_nchw, w_oihw, gamma, beta, running_mean, running_var,
                 eps=1e-5, vmem_limit_mb=32):
    N, Cin, H, W = x_nchw.shape
    Cout, _, KH, KW = w_oihw.shape
    assert (KH, KW) == (7, 7)
    assert H % 4 == 0 and W % 16 == 0, "stem kernel expects H%4==0 and W%16==0"
    pad = 3
    HO, WO = H // 2, W // 2            # conv output  (k=7, s=2, p=3, even H/W)
    PH, PW = HO // 2, WO // 2          # pool output  (k=3, s=2, p=1, even HO/WO)
    Hs, Ws = HO + 3, WO + 3            # space-to-depth(2) coarse grid of padded input
    CIN_P = ((4 * Cin + 15) // 16) * 16  # per-tap channels padded to 16 (K = 16*CIN_P)
    R = _pick_row_block(HO, WO)        # conv rows per block (even, R*WO >= 128 if possible)

    # --- glue (input-sized, no HBM blow-up): NCHW -> NHWC, pad, space-to-depth(2), bf16 ---
    x = jnp.transpose(x_nchw, (0, 2, 3, 1)).astype(jnp.float32)
    xp = jnp.pad(x, ((0, 0), (pad, pad), (pad, pad), (0, 0)))
    xs = xp.reshape(N, Hs, 2, Ws, 2, Cin).transpose(0, 1, 3, 2, 4, 5)
    xs = xs.reshape(N, Hs, Ws, 4 * Cin)                       # channel order = (ph, pw, c)
    xs = jnp.pad(xs, ((0, 0), (0, 0), (0, 0), (0, CIN_P - 4 * Cin))).astype(jnp.bfloat16)

    # --- weights: (O,C,7,7) -> pad to 8x8 -> (16 taps, CIN_P, O) -> flat (16*CIN_P, O);
    #     fold BN scale; bf16 operands, f32 shift ---
    scale = gamma / jnp.sqrt(running_var + eps)
    shift = (beta - running_mean * scale).reshape(1, Cout).astype(jnp.float32)
    w8 = jnp.pad(w_oihw, ((0, 0), (0, 0), (0, 1), (0, 1)))               # (O,C,8,8)
    w2 = w8.reshape(Cout, Cin, 4, 2, 4, 2).transpose(2, 4, 3, 5, 1, 0)   # dh,dw,ph,pw,c,o
    w2 = w2.reshape(16, 4 * Cin, Cout) * scale[None, None, :]
    w2 = jnp.pad(w2, ((0, 0), (0, CIN_P - 4 * Cin), (0, 0)))
    w2 = w2.reshape(16 * CIN_P, Cout).astype(jnp.bfloat16)

    kernel = _make_stem_kernel(WO, PW, R, Cout)

    out_nhwc = pl.pallas_call(
        kernel,
        out_shape=jax.ShapeDtypeStruct((N, PH, PW, Cout), jnp.float32),
        grid=(N, HO // R),
        in_specs=[
            # index_map ignores rb -> image block stays resident across row blocks
            pl.BlockSpec((1, Hs, Ws, CIN_P), lambda n, rb: (n, 0, 0, 0)),
            pl.BlockSpec((16 * CIN_P, Cout), lambda n, rb: (0, 0)),
            pl.BlockSpec((1, Cout), lambda n, rb: (0, 0)),
        ],
        out_specs=pl.BlockSpec((1, R // 2, PW, Cout), lambda n, rb: (n, rb, 0, 0)),
        scratch_shapes=[
            pltpu.VMEM((R, WO + 1, Cout), jnp.float32),     # conv rows + zero left pad
            pltpu.VMEM((R + 1, PW, Cout), jnp.float32),     # column-pooled rows + carry
        ],
        compiler_params=pltpu.CompilerParams(
            dimension_semantics=("parallel", "arbitrary"),
            # conservative default, safe on v5e/v6e/v7x (far above what these blocks need);
            # raise per-generation (<=~48 MiB on v7x) when scaling to 224x224.
            vmem_limit_bytes=vmem_limit_mb * 1024 * 1024,
        ),
    )(xs, w2, shift)

    return jnp.transpose(out_nhwc, (0, 3, 1, 2))   # back to NCHW


if __name__ == "__main__":
    key = jax.random.PRNGKey(0)
    k1, k2, k3, k4, k5, k6 = jax.random.split(key, 6)

    N, Cin, H, W = 2, 3, 32, 32
    Cout = 64

    x = jax.random.normal(k1, (N, Cin, H, W), jnp.float32)
    w = jax.random.normal(k2, (Cout, Cin, 7, 7), jnp.float32) * 0.05
    gamma = 1.0 + 0.1 * jax.random.normal(k3, (Cout,), jnp.float32)
    beta = 0.1 * jax.random.normal(k4, (Cout,), jnp.float32)
    running_mean = 0.01 * jax.random.normal(k5, (Cout,), jnp.float32)
    running_var = 1.0 + 0.1 * jax.random.uniform(k6, (Cout,), jnp.float32)

    out = jax.jit(stem_forward)(x, w, gamma, beta, running_mean, running_var)
    out = jax.block_until_ready(out)

    # reference: lax conv + BN(eval) + relu + reduce_window max-pool (f32)
    conv_ref = lax.conv_general_dilated(
        x, w, (2, 2), ((3, 3), (3, 3)),
        dimension_numbers=("NCHW", "OIHW", "NCHW"))
    scale = gamma / jnp.sqrt(running_var + 1e-5)
    shift = beta - running_mean * scale
    bn_ref = conv_ref * scale[None, :, None, None] + shift[None, :, None, None]
    relu_ref = jnp.maximum(bn_ref, 0.0)
    pool_ref = lax.reduce_window(
        relu_ref, -jnp.inf, lax.max,
        (1, 1, 3, 3), (1, 1, 2, 2), ((0, 0), (0, 0), (1, 1), (1, 1)))

    assert out.shape == (N, Cout, 8, 8), out.shape
    # bf16 matmul operands (f32 accumulate) -> relaxed tolerance vs f32 reference
    assert jnp.allclose(out, pool_ref, atol=3e-2, rtol=3e-2), \
        float(jnp.max(jnp.abs(out - pool_ref)))
    print("KERNEL_OK")
</pallas_src>

<mosaic_0001>
module attributes {stable_mosaic.version = 11 : i64} {
  func.func @kernel(%arg0: i32, %arg1: i32, %arg2: memref<1x19x19x16xbf16, #tpu.memory_space<vmem>>, %arg3: memref<256x64xbf16, #tpu.memory_space<vmem>>, %arg4: memref<1x64xf32, #tpu.memory_space<vmem>>, %arg5: memref<1x4x8x64xf32, #tpu.memory_space<vmem>>, %arg6: memref<8x17x64xf32, #tpu.memory_space<vmem>>, %arg7: memref<9x8x64xf32, #tpu.memory_space<vmem>>) attributes {dimension_semantics = [#tpu.dimension_semantics<parallel>, #tpu.dimension_semantics<arbitrary>], iteration_bounds = array<i64: 2, 2>, scalar_prefetch = 0 : i64, scratch_operands = 2 : i64, tpu.core_type = #tpu.core_type<tc>, window_params = [{transform_indices = @transform_0, window_bounds = array<i64: 1, 19, 19, 16>}, {pipeline_mode = #tpu.pipeline_mode<synchronous>, transform_indices = @transform_1, window_bounds = array<i64: 256, 64>}, {pipeline_mode = #tpu.pipeline_mode<synchronous>, transform_indices = @transform_2, window_bounds = array<i64: 1, 64>}, {transform_indices = @transform_3, window_bounds = array<i64: 1, 4, 8, 64>}]} {
    %c8_i32 = arith.constant 8 : i32
    %0 = arith.muli %arg1, %c8_i32 : i32
    %c0_i32 = arith.constant 0 : i32
    %1 = arith.cmpi eq, %arg1, %c0_i32 : i32
    %2 = arith.extui %1 : i1 to i32
    %c0_i32_0 = arith.constant 0 : i32
    %3 = arith.cmpi ne, %2, %c0_i32_0 : i32
    scf.if %3 {
      %cst_75 = arith.constant 0.000000e+00 : f32
      %217 = vector.broadcast %cst_75 : f32 to vector<8x64xf32>
      %c0_76 = arith.constant 0 : index
      %c0_77 = arith.constant 0 : index
      %c0_78 = arith.constant 0 : index
      %218 = vector.load %arg7[%c0_76, %c0_77, %c0_78] : memref<9x8x64xf32, #tpu.memory_space<vmem>>, vector<1x8x64xf32>
      %219 = vector.shape_cast %218 : vector<1x8x64xf32> to vector<8x64xf32>
      %220 = vector.shape_cast %217 : vector<8x64xf32> to vector<1x8x64xf32>
      tpu.vector_store %arg7[%c0_76, %c0_77, %c0_78], %220 {strides = array<i32>} : memref<9x8x64xf32, #tpu.memory_space<vmem>>, vector<1x8x64xf32>,
    } else {
    }
    %c0_i32_1 = arith.constant 0 : i32
    %4 = arith.addi %0, %c0_i32_1 : i32
    %c0 = arith.constant 0 : index
    %5 = arith.index_cast %4 : i32 to index
    %c0_2 = arith.constant 0 : index
    %c0_3 = arith.constant 0 : index
    %6 = vector.load %arg2[%c0, %5, %c0_2, %c0_3] : memref<1x19x19x16xbf16, #tpu.memory_space<vmem>>, vector<1x1x19x16xbf16>
    %7 = vector.shape_cast %6 : vector<1x1x19x16xbf16> to vector<19x16xbf16>
    %c1_i32 = arith.constant 1 : i32
    %8 = arith.addi %0, %c1_i32 : i32
    %c0_4 = arith.constant 0 : index
    %9 = arith.index_cast %8 : i32 to index
    %c0_5 = arith.constant 0 : index
    %c0_6 = arith.constant 0 : index
    %10 = vector.load %arg2[%c0_4, %9, %c0_5, %c0_6] : memref<1x19x19x16xbf16, #tpu.memory_space<vmem>>, vector<1x1x19x16xbf16>
    %11 = vector.shape_cast %10 : vector<1x1x19x16xbf16> to vector<19x16xbf16>
    %c2_i32 = arith.constant 2 : i32
    %12 = arith.addi %0, %c2_i32 : i32
    %c0_7 = arith.constant 0 : index
    %13 = arith.index_cast %12 : i32 to index
    %c0_8 = arith.constant 0 : index
    %c0_9 = arith.constant 0 : index
    %14 = vector.load %arg2[%c0_7, %13, %c0_8, %c0_9] : memref<1x19x19x16xbf16, #tpu.memory_space<vmem>>, vector<1x1x19x16xbf16>
    %15 = vector.shape_cast %14 : vector<1x1x19x16xbf16> to vector<19x16xbf16>
    %c3_i32 = arith.constant 3 : i32
    %16 = arith.addi %0, %c3_i32 : i32
    %c0_10 = arith.constant 0 : index
    %17 = arith.index_cast %16 : i32 to index
    %c0_11 = arith.constant 0 : index
    %c0_12 = arith.constant 0 : index
    %18 = vector.load %arg2[%c0_10, %17, %c0_11, %c0_12] : memref<1x19x19x16xbf16, #tpu.memory_space<vmem>>, vector<1x1x19x16xbf16>
    %19 = vector.shape_cast %18 : vector<1x1x19x16xbf16> to vector<19x16xbf16>
    %c4_i32 = arith.constant 4 : i32
    %20 = arith.addi %0, %c4_i32 : i32
    %c0_13 = arith.constant 0 : index
    %21 = arith.index_cast %20 : i32 to index
    %c0_14 = arith.constant 0 : index
    %c0_15 = arith.constant 0 : index
    %22 = vector.load %arg2[%c0_13, %21, %c0_14, %c0_15] : memref<1x19x19x16xbf16, #tpu.memory_space<vmem>>, vector<1x1x19x16xbf16>
    %23 = vector.shape_cast %22 : vector<1x1x19x16xbf16> to vector<19x16xbf16>
    %c5_i32 = arith.constant 5 : i32
    %24 = arith.addi %0, %c5_i32 : i32
    %c0_16 = arith.constant 0 : index
    %25 = arith.index_cast %24 : i32 to index
    %c0_17 = arith.constant 0 : index
    %c0_18 = arith.constant 0 : index
    %26 = vector.load %arg2[%c0_16, %25, %c0_17, %c0_18] : memref<1x19x19x16xbf16, #tpu.memory_space<vmem>>, vector<1x1x19x16xbf16>
    %27 = vector.shape_cast %26 : vector<1x1x19x16xbf16> to vector<19x16xbf16>
    %c6_i32 = arith.constant 6 : i32
    %28 = arith.addi %0, %c6_i32 : i32
    %c0_19 = arith.constant 0 : index
    %29 = arith.index_cast %28 : i32 to index
    %c0_20 = arith.constant 0 : index
    %c0_21 = arith.constant 0 : index
    %30 = vector.load %arg2[%c0_19, %29, %c0_20, %c0_21] : memref<1x19x19x16xbf16, #tpu.memory_space<vmem>>, vector<1x1x19x16xbf16>
    %31 = vector.shape_cast %30 : vector<1x1x19x16xbf16> to vector<19x16xbf16>
    %c7_i32 = arith.constant 7 : i32
    %32 = arith.addi %0, %c7_i32 : i32
    %c0_22 = arith.constant 0 : index
    %33 = arith.index_cast %32 : i32 to index
    %c0_23 = arith.constant 0 : index
    %c0_24 = arith.constant 0 : index
    %34 = vector.load %arg2[%c0_22, %33, %c0_23, %c0_24] : memref<1x19x19x16xbf16, #tpu.memory_space<vmem>>, vector<1x1x19x16xbf16>
    %35 = vector.shape_cast %34 : vector<1x1x19x16xbf16> to vector<19x16xbf16>
    %c8_i32_25 = arith.constant 8 : i32
    %36 = arith.addi %0, %c8_i32_25 : i32
    %c0_26 = arith.constant 0 : index
    %37 = arith.index_cast %36 : i32 to index
    %c0_27 = arith.constant 0 : index
    %c0_28 = arith.constant 0 : index
    %38 = vector.load %arg2[%c0_26, %37, %c0_27, %c0_28] : memref<1x19x19x16xbf16, #tpu.memory_space<vmem>>, vector<1x1x19x16xbf16>
    %39 = vector.shape_cast %38 : vector<1x1x19x16xbf16> to vector<19x16xbf16>
    %c9_i32 = arith.constant 9 : i32
    %40 = arith.addi %0, %c9_i32 : i32
    %c0_29 = arith.constant 0 : index
    %41 = arith.index_cast %40 : i32 to index
    %c0_30 = arith.constant 0 : index
    %c0_31 = arith.constant 0 : index
    %42 = vector.load %arg2[%c0_29, %41, %c0_30, %c0_31] : memref<1x19x19x16xbf16, #tpu.memory_space<vmem>>, vector<1x1x19x16xbf16>
    %43 = vector.shape_cast %42 : vector<1x1x19x16xbf16> to vector<19x16xbf16>
    %c10_i32 = arith.constant 10 : i32
    %44 = arith.addi %0, %c10_i32 : i32
    %c0_32 = arith.constant 0 : index
    %45 = arith.index_cast %44 : i32 to index
    %c0_33 = arith.constant 0 : index
    %c0_34 = arith.constant 0 : index
    %46 = vector.load %arg2[%c0_32, %45, %c0_33, %c0_34] : memref<1x19x19x16xbf16, #tpu.memory_space<vmem>>, vector<1x1x19x16xbf16>
    %47 = vector.shape_cast %46 : vector<1x1x19x16xbf16> to vector<19x16xbf16>
    %48 = vector.extract_strided_slice %7 {offsets = [0, 0], sizes = [16, 16], strides = [1, 1]} : vector<19x16xbf16> to vector<16x16xbf16>
    %49 = vector.extract_strided_slice %7 {offsets = [1, 0], sizes = [16, 16], strides = [1, 1]} : vector<19x16xbf16> to vector<16x16xbf16>
    %50 = vector.extract_strided_slice %7 {offsets = [2, 0], sizes = [16, 16], strides = [1, 1]} : vector<19x16xbf16> to vector<16x16xbf16>
    %51 = vector.extract_strided_slice %7 {offsets = [3, 0], sizes = [16, 16], strides = [1, 1]} : vector<19x16xbf16> to vector<16x16xbf16>
    %52 = vector.extract_strided_slice %11 {offsets = [0, 0], sizes = [16, 16], strides = [1, 1]} : vector<19x16xbf16> to vector<16x16xbf16>
    %53 = vector.extract_strided_slice %11 {offsets = [1, 0], sizes = [16, 16], strides = [1, 1]} : vector<19x16xbf16> to vector<16x16xbf16>
    %54 = vector.extract_strided_slice %11 {offsets = [2, 0], sizes = [16, 16], strides = [1, 1]} : vector<19x16xbf16> to vector<16x16xbf16>
    %55 = vector.extract_strided_slice %11 {offsets = [3, 0], sizes = [16, 16], strides = [1, 1]} : vector<19x16xbf16> to vector<16x16xbf16>
    %56 = vector.extract_strided_slice %15 {offsets = [0, 0], sizes = [16, 16], strides = [1, 1]} : vector<19x16xbf16> to vector<16x16xbf16>
    %57 = vector.extract_strided_slice %15 {offsets = [1, 0], sizes = [16, 16], strides = [1, 1]} : vector<19x16xbf16> to vector<16x16xbf16>
    %58 = vector.extract_strided_slice %15 {offsets = [2, 0], sizes = [16, 16], strides = [1, 1]} : vector<19x16xbf16> to vector<16x16xbf16>
    %59 = vector.extract_strided_slice %15 {offsets = [3, 0], sizes = [16, 16], strides = [1, 1]} : vector<19x16xbf16> to vector<16x16xbf16>
    %60 = vector.extract_strided_slice %19 {offsets = [0, 0], sizes = [16, 16], strides = [1, 1]} : vector<19x16xbf16> to vector<16x16xbf16>
    %61 = vector.extract_strided_slice %19 {offsets = [1, 0], sizes = [16, 16], strides = [1, 1]} : vector<19x16xbf16> to vector<16x16xbf16>
    %62 = vector.extract_strided_slice %19 {offsets = [2, 0], sizes = [16, 16], strides = [1, 1]} : vector<19x16xbf16> to vector<16x16xbf16>
    %63 = vector.extract_strided_slice %19 {offsets = [3, 0], sizes = [16, 16], strides = [1, 1]} : vector<19x16xbf16> to vector<16x16xbf16>
    %64 = tpu.concatenate %48, %49, %50, %51, %52, %53, %54, %55, %56, %57, %58, %59, %60, %61, %62, %63 in 1 : vector<16x16xbf16>, vector<16x16xbf16>, vector<16x16xbf16>, vector<16x16xbf16>, vector<16x16xbf16>, vector<16x16xbf16>, vector<16x16xbf16>, vector<16x16xbf16>, vector<16x16xbf16>, vector<16x16xbf16>, vector<16x16xbf16>, vector<16x16xbf16>, vector<16x16xbf16>, vector<16x16xbf16>, vector<16x16xbf16>, vector<16x16xbf16> -> vector<16x256xbf16>
    %65 = vector.extract_strided_slice %11 {offsets = [0, 0], sizes = [16, 16], strides = [1, 1]} : vector<19x16xbf16> to vector<16x16xbf16>
    %66 = vector.extract_strided_slice %11 {offsets = [1, 0], sizes = [16, 16], strides = [1, 1]} : vector<19x16xbf16> to vector<16x16xbf16>
    %67 = vector.extract_strided_slice %11 {offsets = [2, 0], sizes = [16, 16], strides = [1, 1]} : vector<19x16xbf16> to vector<16x16xbf16>
    %68 = vector.extract_strided_slice %11 {offsets = [3, 0], sizes = [16, 16], strides = [1, 1]} : vector<19x16xbf16> to vector<16x16xbf16>
    %69 = vector.extract_strided_slice %15 {offsets = [0, 0], sizes = [16, 16], strides = [1, 1]} : vector<19x16xbf16> to vector<16x16xbf16>
    %70 = vector.extract_strided_slice %15 {offsets = [1, 0], sizes = [16, 16], strides = [1, 1]} : vector<19x16xbf16> to vector<16x16xbf16>
    %71 = vector.extract_strided_slice %15 {offsets = [2, 0], sizes = [16, 16], strides = [1, 1]} : vector<19x16xbf16> to vector<16x16xbf16>
    %72 = vector.extract_strided_slice %15 {offsets = [3, 0], sizes = [16, 16], strides = [1, 1]} : vector<19x16xbf16> to vector<16x16xbf16>
    %73 = vector.extract_strided_slice %19 {offsets = [0, 0], sizes = [16, 16], strides = [1, 1]} : vector<19x16xbf16> to vector<16x16xbf16>
    %74 = vector.extract_strided_slice %19 {offsets = [1, 0], sizes = [16, 16], strides = [1, 1]} : vector<19x16xbf16> to vector<16x16xbf16>
    %75 = vector.extract_strided_slice %19 {offsets = [2, 0], sizes = [16, 16], strides = [1, 1]} : vector<19x16xbf16> to vector<16x16xbf16>
    %76 = vector.extract_strided_slice %19 {offsets = [3, 0], sizes = [16, 16], strides = [1, 1]} : vector<19x16xbf16> to vector<16x16xbf16>
    %77 = vector.extract_strided_slice %23 {offsets = [0, 0], sizes = [16, 16], strides = [1, 1]} : vector<19x16xbf16> to vector<16x16xbf16>
    %78 = vector.extract_strided_slice %23 {offsets = [1, 0], sizes = [16, 16], strides = [1, 1]} : vector<19x16xbf16> to vector<16x16xbf16>
    %79 = vector.extract_strided_slice %23 {offsets = [2, 0], sizes = [16, 16], strides = [1, 1]} : vector<19x16xbf16> to vector<16x16xbf16>
    %80 = vector.extract_strided_slice %23 {offsets = [3, 0], sizes = [16, 16], strides = [1, 1]} : vector<19x16xbf16> to vector<16x16xbf16>
    %81 = tpu.concatenate %65, %66, %67, %68, %69, %70, %71, %72, %73, %74, %75, %76, %77, %78, %79, %80 in 1 : vector<16x16xbf16>, vector<16x16xbf16>, vector<16x16xbf16>, vector<16x16xbf16>, vector<16x16xbf16>, vector<16x16xbf16>, vector<16x16xbf16>, vector<16x16xbf16>, vector<16x16xbf16>, vector<16x16xbf16>, vector<16x16xbf16>, vector<16x16xbf16>, vector<16x16xbf16>, vector<16x16xbf16>, vector<16x16xbf16>, vector<16x16xbf16> -> vector<16x256xbf16>
    %82 = vector.extract_strided_slice %15 {offsets = [0, 0], sizes = [16, 16], strides = [1, 1]} : vector<19x16xbf16> to vector<16x16xbf16>
    %83 = vector.extract_strided_slice %15 {offsets = [1, 0], sizes = [16, 16], strides = [1, 1]} : vector<19x16xbf16> to vector<16x16xbf16>
    %84 = vector.extract_strided_slice %15 {offsets = [2, 0], sizes = [16, 16], strides = [1, 1]} : vector<19x16xbf16> to vector<16x16xbf16>
    %85 = vector.extract_strided_slice %15 {offsets = [3, 0], sizes = [16, 16], strides = [1, 1]} : vector<19x16xbf16> to vector<16x16xbf16>
    %86 = vector.extract_strided_slice %19 {offsets = [0, 0], sizes = [16, 16], strides = [1, 1]} : vector<19x16xbf16> to vector<16x16xbf16>
    %87 = vector.extract_strided_slice %19 {offsets = [1, 0], sizes = [16, 16], strides = [1, 1]} : vector<19x16xbf16> to vector<16x16xbf16>
    %88 = vector.extract_strided_slice %19 {offsets = [2, 0], sizes = [16, 16], strides = [1, 1]} : vector<19x16xbf16> to vector<16x16xbf16>
    %89 = vector.extract_strided_slice %19 {offsets = [3, 0], sizes = [16, 16], strides = [1, 1]} : vector<19x16xbf16> to vector<16x16xbf16>
    %90 = vector.extract_strided_slice %23 {offsets = [0, 0], sizes = [16, 16], strides = [1, 1]} : vector<19x16xbf16> to vector<16x16xbf16>
    %91 = vector.extract_strided_slice %23 {offsets = [1, 0], sizes = [16, 16], strides = [1, 1]} : vector<19x16xbf16> to vector<16x16xbf16>
    %92 = vector.extract_strided_slice %23 {offsets = [2, 0], sizes = [16, 16], strides = [1, 1]} : vector<19x16xbf16> to vector<16x16xbf16>
    %93 = vector.extract_strided_slice %23 {offsets = [3, 0], sizes = [16, 16], strides = [1, 1]} : vector<19x16xbf16> to vector<16x16xbf16>
    %94 = vector.extract_strided_slice %27 {offsets = [0, 0], sizes = [16, 16], strides = [1, 1]} : vector<19x16xbf16> to vector<16x16xbf16>
    %95 = vector.extract_strided_slice %27 {offsets = [1, 0], sizes = [16, 16], strides = [1, 1]} : vector<19x16xbf16> to vector<16x16xbf16>
    %96 = vector.extract_strided_slice %27 {offsets = [2, 0], sizes = [16, 16], strides = [1, 1]} : vector<19x16xbf16> to vector<16x16xbf16>
    %97 = vector.extract_strided_slice %27 {offsets = [3, 0], sizes = [16, 16], strides = [1, 1]} : vector<19x16xbf16> to vector<16x16xbf16>
    %98 = tpu.concatenate %82, %83, %84, %85, %86, %87, %88, %89, %90, %91, %92, %93, %94, %95, %96, %97 in 1 : vector<16x16xbf16>, vector<16x16xbf16>, vector<16x16xbf16>, vector<16x16xbf16>, vector<16x16xbf16>, vector<16x16xbf16>, vector<16x16xbf16>, vector<16x16xbf16>, vector<16x16xbf16>, vector<16x16xbf16>, vector<16x16xbf16>, vector<16x16xbf16>, vector<16x16xbf16>, vector<16x16xbf16>, vector<16x16xbf16>, vector<16x16xbf16> -> vector<16x256xbf16>
    %99 = vector.extract_strided_slice %19 {offsets = [0, 0], sizes = [16, 16], strides = [1, 1]} : vector<19x16xbf16> to vector<16x16xbf16>
    %100 = vector.extract_strided_slice %19 {offsets = [1, 0], sizes = [16, 16], strides = [1, 1]} : vector<19x16xbf16> to vector<16x16xbf16>
    %101 = vector.extract_strided_slice %19 {offsets = [2, 0], sizes = [16, 16], strides = [1, 1]} : vector<19x16xbf16> to vector<16x16xbf16>
    %102 = vector.extract_strided_slice %19 {offsets = [3, 0], sizes = [16, 16], strides = [1, 1]} : vector<19x16xbf16> to vector<16x16xbf16>
    %103 = vector.extract_strided_slice %23 {offsets = [0, 0], sizes = [16, 16], strides = [1, 1]} : vector<19x16xbf16> to vector<16x16xbf16>
    %104 = vector.extract_strided_slice %23 {offsets = [1, 0], sizes = [16, 16], strides = [1, 1]} : vector<19x16xbf16> to vector<16x16xbf16>
    %105 = vector.extract_strided_slice %23 {offsets = [2, 0], sizes = [16, 16], strides = [1, 1]} : vector<19x16xbf16> to vector<16x16xbf16>
    %106 = vector.extract_strided_slice %23 {offsets = [3, 0], sizes = [16, 16], strides = [1, 1]} : vector<19x16xbf16> to vector<16x16xbf16>
    %107 = vector.extract_strided_slice %27 {offsets = [0, 0], sizes = [16, 16], strides = [1, 1]} : vector<19x16xbf16> to vector<16x16xbf16>
    %108 = vector.extract_strided_slice %27 {offsets = [1, 0], sizes = [16, 16], strides = [1, 1]} : vector<19x16xbf16> to vector<16x16xbf16>
    %109 = vector.extract_strided_slice %27 {offsets = [2, 0], sizes = [16, 16], strides = [1, 1]} : vector<19x16xbf16> to vector<16x16xbf16>
    %110 = vector.extract_strided_slice %27 {offsets = [3, 0], sizes = [16, 16], strides = [1, 1]} : vector<19x16xbf16> to vector<16x16xbf16>
    %111 = vector.extract_strided_slice %31 {offsets = [0, 0], sizes = [16, 16], strides = [1, 1]} : vector<19x16xbf16> to vector<16x16xbf16>
    %112 = vector.extract_strided_slice %31 {offsets = [1, 0], sizes = [16, 16], strides = [1, 1]} : vector<19x16xbf16> to vector<16x16xbf16>
    %113 = vector.extract_strided_slice %31 {offsets = [2, 0], sizes = [16, 16], strides = [1, 1]} : vector<19x16xbf16> to vector<16x16xbf16>
    %114 = vector.extract_strided_slice %31 {offsets = [3, 0], sizes = [16, 16], strides = [1, 1]} : vector<19x16xbf16> to vector<16x16xbf16>
    %115 = tpu.concatenate %99, %100, %101, %102, %103, %104, %105, %106, %107, %108, %109, %110, %111, %112, %113, %114 in 1 : vector<16x16xbf16>, vector<16x16xbf16>, vector<16x16xbf16>, vector<16x16xbf16>, vector<16x16xbf16>, vector<16x16xbf16>, vector<16x16xbf16>, vector<16x16xbf16>, vector<16x16xbf16>, vector<16x16xbf16>, vector<16x16xbf16>, vector<16x16xbf16>, vector<16x16xbf16>, vector<16x16xbf16>, vector<16x16xbf16>, vector<16x16xbf16> -> vector<16x256xbf16>
    %116 = vector.extract_strided_slice %23 {offsets = [0, 0], sizes = [16, 16], strides = [1, 1]} : vector<19x16xbf16> to vector<16x16xbf16>
    %117 = vector.extract_strided_slice %23 {offsets = [1, 0], sizes = [16, 16], strides = [1, 1]} : vector<19x16xbf16> to vector<16x16xbf16>
    %118 = vector.extract_strided_slice %23 {offsets = [2, 0], sizes = [16, 16], strides = [1, 1]} : vector<19x16xbf16> to vector<16x16xbf16>
    %119 = vector.extract_strided_slice %23 {offsets = [3, 0], sizes = [16, 16], strides = [1, 1]} : vector<19x16xbf16> to vector<16x16xbf16>
    %120 = vector.extract_strided_slice %27 {offsets = [0, 0], sizes = [16, 16], strides = [1, 1]} : vector<19x16xbf16> to vector<16x16xbf16>
    %121 = vector.extract_strided_slice %27 {offsets = [1, 0], sizes = [16, 16], strides = [1, 1]} : vector<19x16xbf16> to vector<16x16xbf16>
    %122 = vector.extract_strided_slice %27 {offsets = [2, 0], sizes = [16, 16], strides = [1, 1]} : vector<19x16xbf16> to vector<16x16xbf16>
    %123 = vector.extract_strided_slice %27 {offsets = [3, 0], sizes = [16, 16], strides = [1, 1]} : vector<19x16xbf16> to vector<16x16xbf16>
    %124 = vector.extract_strided_slice %31 {offsets = [0, 0], sizes = [16, 16], strides = [1, 1]} : vector<19x16xbf16> to vector<16x16xbf16>
    %125 = vector.extract_strided_slice %31 {offsets = [1, 0], sizes = [16, 16], strides = [1, 1]} : vector<19x16xbf16> to vector<16x16xbf16>
    %126 = vector.extract_strided_slice %31 {offsets = [2, 0], sizes = [16, 16], strides = [1, 1]} : vector<19x16xbf16> to vector<16x16xbf16>
    %127 = vector.extract_strided_slice %31 {offsets = [3, 0], sizes = [16, 16], strides = [1, 1]} : vector<19x16xbf16> to vector<16x16xbf16>
    %128 = vector.extract_strided_slice %35 {offsets = [0, 0], sizes = [16, 16], strides = [1, 1]} : vector<19x16xbf16> to vector<16x16xbf16>
    %129 = vector.extract_strided_slice %35 {offsets = [1, 0], sizes = [16, 16], strides = [1, 1]} : vector<19x16xbf16> to vector<16x16xbf16>
    %130 = vector.extract_strided_slice %35 {offsets = [2, 0], sizes = [16, 16], strides = [1, 1]} : vector<19x16xbf16> to vector<16x16xbf16>
    %131 = vector.extract_strided_slice %35 {offsets = [3, 0], sizes = [16, 16], strides = [1, 1]} : vector<19x16xbf16> to vector<16x16xbf16>
    %132 = tpu.concatenate %116, %117, %118, %119, %120, %121, %122, %123, %124, %125, %126, %127, %128, %129, %130, %131 in 1 : vector<16x16xbf16>, vector<16x16xbf16>, vector<16x16xbf16>, vector<16x16xbf16>, vector<16x16xbf16>, vector<16x16xbf16>, vector<16x16xbf16>, vector<16x16xbf16>, vector<16x16xbf16>, vector<16x16xbf16>, vector<16x16xbf16>, vector<16x16xbf16>, vector<16x16xbf16>, vector<16x16xbf16>, vector<16x16xbf16>, vector<16x16xbf16> -> vector<16x256xbf16>
    %133 = vector.extract_strided_slice %27 {offsets = [0, 0], sizes = [16, 16], strides = [1, 1]} : vector<19x16xbf16> to vector<16x16xbf16>
    %134 = vector.extract_strided_slice %27 {offsets = [1, 0], sizes = [16, 16], strides = [1, 1]} : vector<19x16xbf16> to vector<16x16xbf16>
    %135 = vector.extract_strided_slice %27 {offsets = [2, 0], sizes = [16, 16], strides = [1, 1]} : vector<19x16xbf16> to vector<16x16xbf16>
    %136 = vector.extract_strided_slice %27 {offsets = [3, 0], sizes = [16, 16], strides = [1, 1]} : vector<19x16xbf16> to vector<16x16xbf16>
    %137 = vector.extract_strided_slice %31 {offsets = [0, 0], sizes = [16, 16], strides = [1, 1]} : vector<19x16xbf16> to vector<16x16xbf16>
    %138 = vector.extract_strided_slice %31 {offsets = [1, 0], sizes = [16, 16], strides = [1, 1]} : vector<19x16xbf16> to vector<16x16xbf16>
    %139 = vector.extract_strided_slice %31 {offsets = [2, 0], sizes = [16, 16], strides = [1, 1]} : vector<19x16xbf16> to vector<16x16xbf16>
    %140 = vector.extract_strided_slice %31 {offsets = [3, 0], sizes = [16, 16], strides = [1, 1]} : vector<19x16xbf16> to vector<16x16xbf16>
    %141 = vector.extract_strided_slice %35 {offsets = [0, 0], sizes = [16, 16], strides = [1, 1]} : vector<19x16xbf16> to vector<16x16xbf16>
    %142 = vector.extract_strided_slice %35 {offsets = [1, 0], sizes = [16, 16], strides = [1, 1]} : vector<19x16xbf16> to vector<16x16xbf16>
    %143 = vector.extract_strided_slice %35 {offsets = [2, 0], sizes = [16, 16], strides = [1, 1]} : vector<19x16xbf16> to vector<16x16xbf16>
    %144 = vector.extract_strided_slice %35 {offsets = [3, 0], sizes = [16, 16], strides = [1, 1]} : vector<19x16xbf16> to vector<16x16xbf16>
    %145 = vector.extract_strided_slice %39 {offsets = [0, 0], sizes = [16, 16], strides = [1, 1]} : vector<19x16xbf16> to vector<16x16xbf16>
    %146 = vector.extract_strided_slice %39 {offsets = [1, 0], sizes = [16, 16], strides = [1, 1]} : vector<19x16xbf16> to vector<16x16xbf16>
    %147 = vector.extract_strided_slice %39 {offsets = [2, 0], sizes = [16, 16], strides = [1, 1]} : vector<19x16xbf16> to vector<16x16xbf16>
    %148 = vector.extract_strided_slice %39 {offsets = [3, 0], sizes = [16, 16], strides = [1, 1]} : vector<19x16xbf16> to vector<16x16xbf16>
    %149 = tpu.concatenate %133, %134, %135, %136, %137, %138, %139, %140, %141, %142, %143, %144, %145, %146, %147, %148 in 1 : vector<16x16xbf16>, vector<16x16xbf16>, vector<16x16xbf16>, vector<16x16xbf16>, vector<16x16xbf16>, vector<16x16xbf16>, vector<16x16xbf16>, vector<16x16xbf16>, vector<16x16xbf16>, vector<16x16xbf16>, vector<16x16xbf16>, vector<16x16xbf16>, vector<16x16xbf16>, vector<16x16xbf16>, vector<16x16xbf16>, vector<16x16xbf16> -> vector<16x256xbf16>
    %150 = vector.extract_strided_slice %31 {offsets = [0, 0], sizes = [16, 16], strides = [1, 1]} : vector<19x16xbf16> to vector<16x16xbf16>
    %151 = vector.extract_strided_slice %31 {offsets = [1, 0], sizes = [16, 16], strides = [1, 1]} : vector<19x16xbf16> to vector<16x16xbf16>
    %152 = vector.extract_strided_slice %31 {offsets = [2, 0], sizes = [16, 16], strides = [1, 1]} : vector<19x16xbf16> to vector<16x16xbf16>
    %153 = vector.extract_strided_slice %31 {offsets = [3, 0], sizes = [16, 16], strides = [1, 1]} : vector<19x16xbf16> to vector<16x16xbf16>
    %154 = vector.extract_strided_slice %35 {offsets = [0, 0], sizes = [16, 16], strides = [1, 1]} : vector<19x16xbf16> to vector<16x16xbf16>
    %155 = vector.extract_strided_slice %35 {offsets = [1, 0], sizes = [16, 16], strides = [1, 1]} : vector<19x16xbf16> to vector<16x16xbf16>
    %156 = vector.extract_strided_slice %35 {offsets = [2, 0], sizes = [16, 16], strides = [1, 1]} : vector<19x16xbf16> to vector<16x16xbf16>
    %157 = vector.extract_strided_slice %35 {offsets = [3, 0], sizes = [16, 16], strides = [1, 1]} : vector<19x16xbf16> to vector<16x16xbf16>
    %158 = vector.extract_strided_slice %39 {offsets = [0, 0], sizes = [16, 16], strides = [1, 1]} : vector<19x16xbf16> to vector<16x16xbf16>
    %159 = vector.extract_strided_slice %39 {offsets = [1, 0], sizes = [16, 16], strides = [1, 1]} : vector<19x16xbf16> to vector<16x16xbf16>
    %160 = vector.extract_strided_slice %39 {offsets = [2, 0], sizes = [16, 16], strides = [1, 1]} : vector<19x16xbf16> to vector<16x16xbf16>
    %161 = vector.extract_strided_slice %39 {offsets = [3, 0], sizes = [16, 16], strides = [1, 1]} : vector<19x16xbf16> to vector<16x16xbf16>
    %162 = vector.extract_strided_slice %43 {offsets = [0, 0], sizes = [16, 16], strides = [1, 1]} : vector<19x16xbf16> to vector<16x16xbf16>
    %163 = vector.extract_strided_slice %43 {offsets = [1, 0], sizes = [16, 16], strides = [1, 1]} : vector<19x16xbf16> to vector<16x16xbf16>
    %164 = vector.extract_strided_slice %43 {offsets = [2, 0], sizes = [16, 16], strides = [1, 1]} : vector<19x16xbf16> to vector<16x16xbf16>
    %165 = vector.extract_strided_slice %43 {offsets = [3, 0], sizes = [16, 16], strides = [1, 1]} : vector<19x16xbf16> to vector<16x16xbf16>
    %166 = tpu.concatenate %150, %151, %152, %153, %154, %155, %156, %157, %158, %159, %160, %161, %162, %163, %164, %165 in 1 : vector<16x16xbf16>, vector<16x16xbf16>, vector<16x16xbf16>, vector<16x16xbf16>, vector<16x16xbf16>, vector<16x16xbf16>, vector<16x16xbf16>, vector<16x16xbf16>, vector<16x16xbf16>, vector<16x16xbf16>, vector<16x16xbf16>, vector<16x16xbf16>, vector<16x16xbf16>, vector<16x16xbf16>, vector<16x16xbf16>, vector<16x16xbf16> -> vector<16x256xbf16>
    %167 = vector.extract_strided_slice %35 {offsets = [0, 0], sizes = [16, 16], strides = [1, 1]} : vector<19x16xbf16> to vector<16x16xbf16>
    %168 = vector.extract_strided_slice %35 {offsets = [1, 0], sizes = [16, 16], strides = [1, 1]} : vector<19x16xbf16> to vector<16x16xbf16>
    %169 = vector.extract_strided_slice %35 {offsets = [2, 0], sizes = [16, 16], strides = [1, 1]} : vector<19x16xbf16> to vector<16x16xbf16>
    %170 = vector.extract_strided_slice %35 {offsets = [3, 0], sizes = [16, 16], strides = [1, 1]} : vector<19x16xbf16> to vector<16x16xbf16>
    %171 = vector.extract_strided_slice %39 {offsets = [0, 0], sizes = [16, 16], strides = [1, 1]} : vector<19x16xbf16> to vector<16x16xbf16>
    %172 = vector.extract_strided_slice %39 {offsets = [1, 0], sizes = [16, 16], strides = [1, 1]} : vector<19x16xbf16> to vector<16x16xbf16>
    %173 = vector.extract_strided_slice %39 {offsets = [2, 0], sizes = [16, 16], strides = [1, 1]} : vector<19x16xbf16> to vector<16x16xbf16>
    %174 = vector.extract_strided_slice %39 {offsets = [3, 0], sizes = [16, 16], strides = [1, 1]} : vector<19x16xbf16> to vector<16x16xbf16>
    %175 = vector.extract_strided_slice %43 {offsets = [0, 0], sizes = [16, 16], strides = [1, 1]} : vector<19x16xbf16> to vector<16x16xbf16>
    %176 = vector.extract_strided_slice %43 {offsets = [1, 0], sizes = [16, 16], strides = [1, 1]} : vector<19x16xbf16> to vector<16x16xbf16>
    %177 = vector.extract_strided_slice %43 {offsets = [2, 0], sizes = [16, 16], strides = [1, 1]} : vector<19x16xbf16> to vector<16x16xbf16>
    %178 = vector.extract_strided_slice %43 {offsets = [3, 0], sizes = [16, 16], strides = [1, 1]} : vector<19x16xbf16> to vector<16x16xbf16>
    %179 = vector.extract_strided_slice %47 {offsets = [0, 0], sizes = [16, 16], strides = [1, 1]} : vector<19x16xbf16> to vector<16x16xbf16>
    %180 = vector.extract_strided_slice %47 {offsets = [1, 0], sizes = [16, 16], strides = [1, 1]} : vector<19x16xbf16> to vector<16x16xbf16>
    %181 = vector.extract_strided_slice %47 {offsets = [2, 0], sizes = [16, 16], strides = [1, 1]} : vector<19x16xbf16> to vector<16x16xbf16>
    %182 = vector.extract_strided_slice %47 {offsets = [3, 0], sizes = [16, 16], strides = [1, 1]} : vector<19x16xbf16> to vector<16x16xbf16>
    %183 = tpu.concatenate %167, %168, %169, %170, %171, %172, %173, %174, %175, %176, %177, %178, %179, %180, %181, %182 in 1 : vector<16x16xbf16>, vector<16x16xbf16>, vector<16x16xbf16>, vector<16x16xbf16>, vector<16x16xbf16>, vector<16x16xbf16>, vector<16x16xbf16>, vector<16x16xbf16>, vector<16x16xbf16>, vector<16x16xbf16>, vector<16x16xbf16>, vector<16x16xbf16>, vector<16x16xbf16>, vector<16x16xbf16>, vector<16x16xbf16>, vector<16x16xbf16> -> vector<16x256xbf16>
    %184 = tpu.concatenate %64, %81, %98, %115, %132, %149, %166, %183 in 0 : vector<16x256xbf16>, vector<16x256xbf16>, vector<16x256xbf16>, vector<16x256xbf16>, vector<16x256xbf16>, vector<16x256xbf16>, vector<16x256xbf16>, vector<16x256xbf16> -> vector<128x256xbf16>
    %c0_35 = arith.constant 0 : index
    %c0_36 = arith.constant 0 : index
    %185 = vector.load %arg3[%c0_35, %c0_36] : memref<256x64xbf16, #tpu.memory_space<vmem>>, vector<256x64xbf16>
    %cst = arith.constant dense<0.000000e+00> : vector<128x64xf32>
    %186 = tpu.matmul %184, %185, %cst {dimension_numbers = #tpu.dot_dimension_numbers<[1], [0], [0], [1], [0, 0, 1, 1], [], []>} : vector<128x256xbf16>, vector<256x64xbf16>, vector<128x64xf32> -> vector<128x64xf32>
    %c0_37 = arith.constant 0 : index
    %c0_38 = arith.constant 0 : index
    %187 = vector.load %arg4[%c0_37, %c0_38] : memref<1x64xf32, #tpu.memory_space<vmem>>, vector<1x64xf32>
    %188 = vector.broadcast %187 : vector<1x64xf32> to vector<128x64xf32>
    %189 = arith.addf %186, %188 : vector<128x64xf32>
    %cst_39 = arith.constant 0.000000e+00 : f32
    %190 = vector.broadcast %cst_39 : f32 to vector<128x64xf32>
    %191 = arith.maximumf %189, %190 : vector<128x64xf32>
    %cst_40 = arith.constant 0.000000e+00 : f32
    %192 = vector.broadcast %cst_40 : f32 to vector<8x64xf32>
    %c0_41 = arith.constant 0 : index
    %c0_42 = arith.constant 0 : index
    %c0_43 = arith.constant 0 : index
    %193 = vector.load %arg6[%c0_41, %c0_42, %c0_43] : memref<8x17x64xf32, #tpu.memory_space<vmem>>, vector<8x1x64xf32>
    %194 = vector.shape_cast %193 : vector<8x1x64xf32> to vector<8x64xf32>
    %195 = vector.shape_cast %192 : vector<8x64xf32> to vector<8x1x64xf32>
    tpu.vector_store %arg6[%c0_41, %c0_42, %c0_43], %195 {strides = array<i32>} : memref<8x17x64xf32, #tpu.memory_space<vmem>>, vector<8x1x64xf32>,
    %196 = vector.shape_cast %191 : vector<128x64xf32> to vector<8x16x64xf32>
    %c0_44 = arith.constant 0 : index
    %c1 = arith.constant 1 : index
    %c0_45 = arith.constant 0 : index
    %197 = vector.load %arg6[%c0_44, %c1, %c0_45] : memref<8x17x64xf32, #tpu.memory_space<vmem>>, vector<8x16x64xf32>
    tpu.vector_store %arg6[%c0_44, %c1, %c0_45], %196 {strides = array<i32>} : memref<8x17x64xf32, #tpu.memory_space<vmem>>, vector<8x16x64xf32>,
    %c0_46 = arith.constant 0 : index
    %c0_47 = arith.constant 0 : index
    %c0_48 = arith.constant 0 : index
    %198 = tpu.strided_load %arg6[%c0_46, %c0_47, %c0_48] {strides = array<i32: 1, 2, 1>} : memref<8x17x64xf32, #tpu.memory_space<vmem>>, vector<8x8x64xf32>
    %c0_49 = arith.constant 0 : index
    %c1_50 = arith.constant 1 : index
    %c0_51 = arith.constant 0 : index
    %199 = tpu.strided_load %arg6[%c0_49, %c1_50, %c0_51] {strides = array<i32: 1, 2, 1>} : memref<8x17x64xf32, #tpu.memory_space<vmem>>, vector<8x8x64xf32>
    %200 = arith.maximumf %198, %199 : vector<8x8x64xf32>
    %c0_52 = arith.constant 0 : index
    %c2 = arith.constant 2 : index
    %c0_53 = arith.constant 0 : index
    %201 = tpu.strided_load %arg6[%c0_52, %c2, %c0_53] {strides = array<i32: 1, 2, 1>} : memref<8x17x64xf32, #tpu.memory_space<vmem>>, vector<8x8x64xf32>
    %202 = arith.maximumf %200, %201 : vector<8x8x64xf32>
    %c1_54 = arith.constant 1 : index
    %c0_55 = arith.constant 0 : index
    %c0_56 = arith.constant 0 : index
    %203 = vector.load %arg7[%c1_54, %c0_55, %c0_56] : memref<9x8x64xf32, #tpu.memory_space<vmem>>, vector<8x8x64xf32>
    tpu.vector_store %arg7[%c1_54, %c0_55, %c0_56], %202 {strides = array<i32>} : memref<9x8x64xf32, #tpu.memory_space<vmem>>, vector<8x8x64xf32>,
    %c0_57 = arith.constant 0 : index
    %c0_58 = arith.constant 0 : index
    %c0_59 = arith.constant 0 : index
    %204 = tpu.strided_load %arg7[%c0_57, %c0_58, %c0_59] {strides = array<i32: 2, 1, 1>} : memref<9x8x64xf32, #tpu.memory_space<vmem>>, vector<4x8x64xf32>
    %c1_60 = arith.constant 1 : index
    %c0_61 = arith.constant 0 : index
    %c0_62 = arith.constant 0 : index
    %205 = tpu.strided_load %arg7[%c1_60, %c0_61, %c0_62] {strides = array<i32: 2, 1, 1>} : memref<9x8x64xf32, #tpu.memory_space<vmem>>, vector<4x8x64xf32>
    %206 = arith.maximumf %204, %205 : vector<4x8x64xf32>
    %c2_63 = arith.constant 2 : index
    %c0_64 = arith.constant 0 : index
    %c0_65 = arith.constant 0 : index
    %207 = tpu.strided_load %arg7[%c2_63, %c0_64, %c0_65] {strides = array<i32: 2, 1, 1>} : memref<9x8x64xf32, #tpu.memory_space<vmem>>, vector<4x8x64xf32>
    %208 = arith.maximumf %206, %207 : vector<4x8x64xf32>
    %c0_66 = arith.constant 0 : index
    %c0_67 = arith.constant 0 : index
    %c0_68 = arith.constant 0 : index
    %c0_69 = arith.constant 0 : index
    %209 = vector.load %arg5[%c0_66, %c0_67, %c0_68, %c0_69] : memref<1x4x8x64xf32, #tpu.memory_space<vmem>>, vector<1x4x8x64xf32>
    %210 = vector.shape_cast %209 : vector<1x4x8x64xf32> to vector<4x8x64xf32>
    %211 = vector.shape_cast %208 : vector<4x8x64xf32> to vector<1x4x8x64xf32>
    tpu.vector_store %arg5[%c0_66, %c0_67, %c0_68, %c0_69], %211 {strides = array<i32>} : memref<1x4x8x64xf32, #tpu.memory_space<vmem>>, vector<1x4x8x64xf32>,
    %c8 = arith.constant 8 : index
    %c0_70 = arith.constant 0 : index
    %c0_71 = arith.constant 0 : index
    %212 = vector.load %arg7[%c8, %c0_70, %c0_71] : memref<9x8x64xf32, #tpu.memory_space<vmem>>, vector<1x8x64xf32>
    %213 = vector.shape_cast %212 : vector<1x8x64xf32> to vector<8x64xf32>
    %c0_72 = arith.constant 0 : index
    %c0_73 = arith.constant 0 : index
    %c0_74 = arith.constant 0 : index
    %214 = vector.load %arg7[%c0_72, %c0_73, %c0_74] : memref<9x8x64xf32, #tpu.memory_space<vmem>>, vector<1x8x64xf32>
    %215 = vector.shape_cast %214 : vector<1x8x64xf32> to vector<8x64xf32>
    %216 = vector.shape_cast %213 : vector<8x64xf32> to vector<1x8x64xf32>
    tpu.vector_store %arg7[%c0_72, %c0_73, %c0_74], %216 {strides = array<i32>} : memref<9x8x64xf32, #tpu.memory_space<vmem>>, vector<1x8x64xf32>,
    return
  }
  func.func @transform_0(%arg0: i32, %arg1: i32) -> (i32, i32, i32, i32) {
    %c0_i32 = arith.constant 0 : i32
    %c0_i32_0 = arith.constant 0 : i32
    %c0_i32_1 = arith.constant 0 : i32
    %c0_i32_2 = arith.constant 0 : i32
    return %arg0, %c0_i32, %c0_i32_0, %c0_i32_1 : i32, i32, i32, i32
  }
  func.func @transform_1(%arg0: i32, %arg1: i32) -> (i32, i32) {
    %c0_i32 = arith.constant 0 : i32
    %c0_i32_0 = arith.constant 0 : i32
    %c0_i32_1 = arith.constant 0 : i32
    return %c0_i32, %c0_i32_0 : i32, i32
  }
  func.func @transform_2(%arg0: i32, %arg1: i32) -> (i32, i32) {
    %c0_i32 = arith.constant 0 : i32
    %c0_i32_0 = arith.constant 0 : i32
    %c0_i32_1 = arith.constant 0 : i32
    return %c0_i32, %c0_i32_0 : i32, i32
  }
  func.func @transform_3(%arg0: i32, %arg1: i32) -> (i32, i32, i32, i32) {
    %c0_i32 = arith.constant 0 : i32
    %c0_i32_0 = arith.constant 0 : i32
    %c0_i32_1 = arith.constant 0 : i32
    return %arg0, %arg1, %c0_i32, %c0_i32_0 : i32, i32, i32, i32
  }
}

</mosaic_0001>

<llo_original>
// kernel: stem_forward.1
$region0: #{stem_forward.1}
  #allocation0 [shape = 'u32[]', space=smem, size = 0x4, offset = 0x4, fixed_abs, tag = 'smem constant byte address 0x4 - core index']
  #allocation1 [shape = 'u32[72,128]{1,0:T(1,128)}', space=vmem, size = 0x9000, scoped, tag = 'internal scratch']
  #allocation2 [shape = 'f32[8,17,64]{2,1,0:T(8,128)}', space=vmem, size = 0x18000, scoped, tag = 'scratch operand']
  #allocation3 [shape = 'f32[9,8,64]{2,1,0:T(8,128)}', space=vmem, size = 0x9000, scoped, tag = 'scratch operand']
  %s0 = inlined_call_operand.vmem [shape: bf16[2,19,19,16], index: 0, kind: input, shape index: {}]
  %s1 = inlined_call_operand.vmem [shape: bf16[256,64], index: 1, kind: input, shape index: {}]
  %s2 = inlined_call_operand.vmem [shape: f32[1,64], index: 2, kind: input, shape index: {}]
  %s3 = inlined_call_operand.hbm [shape: f32[2,8,8,64], index: 3, kind: output, shape index: {}]
  %s4 = sld [smem:[#allocation0]]
  $region49: #{stem_forward.1} parent=0
    _
  %s6 = ssub.s32 1, %s4
  %s7 = scalar_select 0, %s6, %s4
  $region1: #{stem_forward.1} parent=0
    #allocation4 [shape = 'u8[32768]{0}', space=vmem, size = 0x8000, scoped, tag = 'output window, operand 0']
    #allocation5 [shape = 's32[2]{0}', space=sflag, size = 0x8, scoped, tag = 'scoped memory for stem_forward.1']
    %8 = vsyncpa [#allocation5], 0
    %s9 = scalar_lea.sflag [#allocation5], 1
    %10 = vsyncpa %s9, 0
    loop: start=0, step=1, limit=6
    $region2: #{stem_forward.1} parent=1 // loop_pre_header
      _
    $region3: #{stem_forward.1} parent=1 // loop_header
      %s12 = sphi 0, %s16
      %p13 = scmp.ge.s32.totalorder %s12, 6
      %s19 = sphi 0, %s31
      %s20 = sphi 0, %s27
      %s21 = sphi 0, %s19
      %s22 = sphi 0, %s20
      %s23 = sphi 0, %s21
      %s24 = sphi 0, %s22
      %s34 = sphi 0, %s36
      %s37 = sphi 0, %s34
      %s38 = sphi 0, %s37
      %s54 = sphi 0, %s38
      %s58 = sphi 0, %s58
      %s60 = sphi 0, %s58
      %s61 = sphi 0, %s60
      %s75 = sphi 0, %s61
      %s79 = sphi 0, %s79
      %s81 = sphi 0, %s79
      %s82 = sphi 0, %s81
      %s96 = sphi 0, %s82
      %s104 = sphi 0, %s106
      %s107 = sphi 0, %s104
      %s108 = sphi 0, %s107
      %s124 = sphi 0, %s108
    $region4: #{stem_forward.1} parent=1 // loop_header_branch
      %15 = sbr.rel (%p13) target = $region8
    $region5: #{stem_forward.1} parent=1 // loop_body
      %s17 = ssub.s32 %s12, 1
      %s18 = ssub.s32 %s12, 2
      %s25 = sadd.s32 1, %s20
      %p26 = scmp.ge.s32.totalorder %s25, 2
      %s27 = scalar_select %p26, 0, %s25
      %s28 = sadd.s32 1, %s19
      %s29 = scalar_select %p26, %s28, %s19
      %p30 = scmp.ge.s32.totalorder %s29, 2
      %s31 = scalar_select %p30, 0, %s29
      %s32 = ssub.s32 %s19, %s31
      %p33 = scmp.eq.s32.totalorder %s32, 0
      %s35 = sadd.s32 %s34, 1
      %s36 = scalar_select %p33, %s34, %s35
      %p39 = pneg %p33
      %p40 = scmp.eq.s32.totalorder %s12, 3
      %p41 = por %p39, %p40
      %p42 = scmp.ne.s32.totalorder %s34, %s37
      %p43 = scmp.eq.s32.totalorder %s12, 0
      %p44 = por %p42, %p43
      %p45 = scmp.ne.s32.totalorder %s34, %s37
      %p46 = scmp.eq.s32.totalorder %s17, 3
      %p47 = por %p45, %p46
      %p48 = scmp.ne.s32.totalorder %s37, %s38
      %p49 = scmp.eq.s32.totalorder %s17, 0
      %p50 = por %p48, %p49
      %p51 = scmp.ne.s32.totalorder %s37, %s38
      %p52 = scmp.eq.s32.totalorder %s18, 3
      %p53 = por %p51, %p52
      %p55 = scmp.ne.s32.totalorder %s38, %s54
      %p56 = scmp.eq.s32.totalorder %s18, 0
      %p57 = por %p55, %p56
      %s59 = sadd.s32 %s58, 1
      %p62 = scmp.eq.s32.totalorder %s12, 3
      %p63 = scmp.ne.s32.totalorder %s58, %s60
      %p64 = scmp.eq.s32.totalorder %s12, 0
      %p65 = por %p63, %p64
      %p66 = scmp.ne.s32.totalorder %s58, %s60
      %p67 = scmp.eq.s32.totalorder %s17, 3
      %p68 = por %p66, %p67
      %p69 = scmp.ne.s32.totalorder %s60, %s61
      %p70 = scmp.eq.s32.totalorder %s17, 0
      %p71 = por %p69, %p70
      %p72 = scmp.ne.s32.totalorder %s60, %s61
      %p73 = scmp.eq.s32.totalorder %s18, 3
      %p74 = por %p72, %p73
      %p76 = scmp.ne.s32.totalorder %s61, %s75
      %p77 = scmp.eq.s32.totalorder %s18, 0
      %p78 = por %p76, %p77
      %s80 = sadd.s32 %s79, 1
      %p83 = scmp.eq.s32.totalorder %s12, 3
      %p84 = scmp.ne.s32.totalorder %s79, %s81
      %p85 = scmp.eq.s32.totalorder %s12, 0
      %p86 = por %p84, %p85
      %p87 = scmp.ne.s32.totalorder %s79, %s81
      %p88 = scmp.eq.s32.totalorder %s17, 3
      %p89 = por %p87, %p88
      %p90 = scmp.ne.s32.totalorder %s81, %s82
      %p91 = scmp.eq.s32.totalorder %s17, 0
      %p92 = por %p90, %p91
      %p93 = scmp.ne.s32.totalorder %s81, %s82
      %p94 = scmp.eq.s32.totalorder %s18, 3
      %p95 = por %p93, %p94
      %p97 = scmp.ne.s32.totalorder %s82, %s96
      %p98 = scmp.eq.s32.totalorder %s18, 0
      %p99 = por %p97, %p98
      %s100 = ssub.s32 %s19, %s31
      %s101 = ssub.s32 %s20, %s27
      %s102 = sor.u32 %s100, %s101
      %p103 = scmp.eq.s32.totalorder %s102, 0
      %s105 = sadd.s32 %s104, 1
      %s106 = scalar_select %p103, %s104, %s105
      %p109 = pneg %p103
      %p110 = scmp.eq.s32.totalorder %s12, 3
      %p111 = por %p109, %p110
      %p112 = scmp.ne.s32.totalorder %s104, %s107
      %p113 = scmp.eq.s32.totalorder %s12, 0
      %p114 = por %p112, %p113
      %p115 = scmp.ne.s32.totalorder %s104, %s107
      %p116 = scmp.eq.s32.totalorder %s17, 3
      %p117 = por %p115, %p116
      %p118 = scmp.ne.s32.totalorder %s107, %s108
      %p119 = scmp.eq.s32.totalorder %s17, 0
      %p120 = por %p118, %p119
      %p121 = scmp.ne.s32.totalorder %s107, %s108
      %p122 = scmp.eq.s32.totalorder %s18, 3
      %p123 = por %p121, %p122
      %p125 = scmp.ne.s32.totalorder %s108, %s124
      %p126 = scmp.eq.s32.totalorder %s18, 0
      %p127 = por %p125, %p126
      %p128 = scmp.le.s32.totalorder 1, %s12
      %p129 = scmp.lt.s32.totalorder %s12, 5
      %p130 = pnand %p128, %p129
      %p131 = pneg %p130
      // Predicated region
      $region9: #{stem_forward.1} parent=5 // pred_check
        _
      $region10: #{stem_forward.1} parent=5 // pred_check_branch
        %133 = sbr.rel (%p130) target = $region12
      $region11: #{stem_forward.1} parent=5 // pred_region
        %s134 = ssub.s32 %s12, 1
        // Predicated region
        $region13: #{stem_forward.1} parent=11 // pred_check
          %p135 = pneg %p71
        $region14: #{stem_forward.1} parent=11 // pred_check_branch
          %137 = sbr.rel (%p135) target = $region16
        $region15: #{stem_forward.1} parent=11 // pred_region
          _
        $region16: #{stem_forward.1} parent=11 // pred_fallthru
          _
        // Predicated region
        $region17: #{stem_forward.1} parent=11 // pred_check
          %p138 = pneg %p92
        $region18: #{stem_forward.1} parent=11 // pred_check_branch
          %140 = sbr.rel (%p138) target = $region20
        $region19: #{stem_forward.1} parent=11 // pred_region
          _
        $region20: #{stem_forward.1} parent=11 // pred_fallthru
          _
      $region12: #{stem_forward.1} parent=5 // pred_fallthru
        _
      %p141 = scmp.lt.s32.totalorder %s12, 4
      // Predicated region
      $region21: #{stem_forward.1} parent=5 // pred_check
        %p142 = pneg %p141
      $region22: #{stem_forward.1} parent=5 // pred_check_branch
        %144 = sbr.rel (%p142) target = $region24
      $region23: #{stem_forward.1} parent=5 // pred_region
        // Predicated region
        $region25: #{stem_forward.1} parent=23 // pred_check
          %p145 = pneg %p44
        $region26: #{stem_forward.1} parent=23 // pred_check_branch
          %147 = sbr.rel (%p145) target = $region28
        $region27: #{stem_forward.1} parent=23 // pred_region
          %p148 = scmp.lt.s32.totalorder %s19, 1
          %s149 = scalar_select %p148, %s19, 1
          %s150 = smul.addr %s149, 57
          %s151 = smul.addr %s150, 4
          %s152 = scalar_lea.vmem %s0, %s151
        $region28: #{stem_forward.1} parent=23 // pred_fallthru
          _
      $region24: #{stem_forward.1} parent=5 // pred_fallthru
        _
      %p153 = scmp.le.s32.totalorder 1, %s12
      %p154 = scmp.lt.s32.totalorder %s12, 5
      %p155 = pnand %p153, %p154
      %p156 = pneg %p155
      // Predicated region
      $region29: #{stem_forward.1} parent=5 // pred_check
        _
      $region30: #{stem_forward.1} parent=5 // pred_check_branch
        %158 = sbr.rel (%p155) target = $region32
      $region31: #{stem_forward.1} parent=5 // pred_region
        %s159 = ssub.s32 %s12, 1
        %p160 = scmp.lt.s32.totalorder %s21, 1
        %s161 = scalar_select %p160, %s21, 1
        %s162 = smul.addr %s161, 57
        %s163 = smul.addr %s162, 4
        %s164 = scalar_lea.vmem %s0, %s163
        %p165 = pneg %p50
        %p166 = pneg %p47
        %p167 = pneg %p71
        %p168 = pneg %p68
        %p169 = pneg %p92
        %p170 = pneg %p89
        %p171 = pneg %p120
        %p172 = pneg %p117
        %s173 = sand.u32 %s107, 1
        %s174 = scalar_lea.sflag [#allocation5], %s173
        %s175 = sand.u32 %s107, 1
        %s176 = smul.addr %s175, 32
        %s177 = scalar_lea.vmem [#allocation4], %s176
        %p178 = scmp.lt.s32.totalorder %s21, 1
        %s179 = scalar_select %p178, %s21, 1
        %s180 = smul.addr %s179, 57
        %s181 = smul.addr %s180, 4
        %s182 = scalar_lea.vmem %s0, %s181
        %s183 = smul.u32 4, %s22
        %s184 = smul.u32 %s22, 8
        %p185 = scmp.eq.s32.totalorder %s22, 0
        // Predicated region
        $region33: #{stem_forward.1} parent=31 // pred_check
          %p186 = pneg %p185
        $region34: #{stem_forward.1} parent=31 // pred_check_branch
          %188 = sbr.rel (%p186) target = $region36
        $region35: #{stem_forward.1} parent=31 // pred_region
          %vm189 = vcmask 523264
          %190 = vst.msk [vmem:[#allocation3] sm:$0xff] %vm189, 0.0
        $region36: #{stem_forward.1} parent=31 // pred_fallthru
          _
        %s191 = smul.u32 %s184, 3
        %s192 = smul.addr %s191, 4
        %s193 = scalar_lea.vmem %s182, %s192
        %v194 = vld [vmem:[%s193] sm:$0xf]
        %v195 = vld [vmem:[%s193 + $0x4] sm:$0xf]
        %v196 = vld [vmem:[%s193 + $0x8] sm:$0x3]
        %s197 = sadd.s32 %s184, 1
        %s198 = smul.u32 %s197, 3
        %s199 = smul.addr %s198, 4
        %s200 = scalar_lea.vmem %s182, %s199
        %v201 = vld [vmem:[%s200] sm:$0xf]
        %v202 = vld [vmem:[%s200 + $0x4] sm:$0xf]
        %v203 = vld [vmem:[%s200 + $0x8] sm:$0x3]
        %s204 = sadd.s32 %s184, 2
        %s205 = smul.u32 %s204, 3
        %s206 = smul.addr %s205, 4
        %s207 = scalar_lea.vmem %s182, %s206
        %v208 = vld [vmem:[%s207] sm:$0xf]
        %v209 = vld [vmem:[%s207 + $0x4] sm:$0xf]
        %v210 = vld [vmem:[%s207 + $0x8] sm:$0x3]
        %s211 = sadd.s32 %s184, 3
        %s212 = smul.u32 %s211, 3
        %s213 = smul.addr %s212, 4
        %s214 = scalar_lea.vmem %s182, %s213
        %v215 = vld [vmem:[%s214] sm:$0xf]
        %v216 = vld [vmem:[%s214 + $0x4] sm:$0xf]
        %v217 = vld [vmem:[%s214 + $0x8] sm:$0x3]
        %s218 = sadd.s32 %s184, 4
        %s219 = smul.u32 %s218, 3
        %s220 = smul.addr %s219, 4
        %s221 = scalar_lea.vmem %s182, %s220
        %v222 = vld [vmem:[%s221] sm:$0xf]
        %v223 = vld [vmem:[%s221 + $0x4] sm:$0xf]
        %v224 = vld [vmem:[%s221 + $0x8] sm:$0x3]
        %s225 = sadd.s32 %s184, 5
        %s226 = smul.u32 %s225, 3
        %s227 = smul.addr %s226, 4
        %s228 = scalar_lea.vmem %s182, %s227
        %v229 = vld [vmem:[%s228] sm:$0xf]
        %v230 = vld [vmem:[%s228 + $0x4] sm:$0xf]
        %v231 = vld [vmem:[%s228 + $0x8] sm:$0x3]
        %s232 = sadd.s32 %s184, 6
        %s233 = smul.u32 %s232, 3
        %s234 = smul.addr %s233, 4
        %s235 = scalar_lea.vmem %s182, %s234
        %v236 = vld [vmem:[%s235] sm:$0xf]
        %v237 = vld [vmem:[%s235 + $0x4] sm:$0xf]
        %v238 = vld [vmem:[%s235 + $0x8] sm:$0x3]
        %s239 = sadd.s32 %s184, 7
        %s240 = smul.u32 %s239, 3
        %s241 = smul.addr %s240, 4
        %s242 = scalar_lea.vmem %s182, %s241
        %v243 = vld [vmem:[%s242] sm:$0xf]
        %v244 = vld [vmem:[%s242 + $0x4] sm:$0xf]
        %v245 = vld [vmem:[%s242 + $0x8] sm:$0x3]
        %s246 = sadd.s32 %s184, 8
        %s247 = smul.u32 %s246, 3
        %s248 = smul.addr %s247, 4
        %s249 = scalar_lea.vmem %s182, %s248
        %v250 = vld [vmem:[%s249] sm:$0xf]
        %v251 = vld [vmem:[%s249 + $0x4] sm:$0xf]
        %v252 = vld [vmem:[%s249 + $0x8] sm:$0x3]
        %s253 = sadd.s32 %s184, 9
        %s254 = smul.u32 %s253, 3
        %s255 = smul.addr %s254, 4
        %s256 = scalar_lea.vmem %s182, %s255
        %v257 = vld [vmem:[%s256] sm:$0xf]
        %v258 = vld [vmem:[%s256 + $0x4] sm:$0xf]
        %v259 = vld [vmem:[%s256 + $0x8] sm:$0x3]
        %s260 = sadd.s32 %s184, 10
        %s261 = smul.u32 %s260, 3
        %s262 = smul.addr %s261, 4
        %s263 = scalar_lea.vmem %s182, %s262
        %v264 = vld [vmem:[%s263] sm:$0xf]
        %v265 = vld [vmem:[%s263 + $0x4] sm:$0xf]
        %v266 = vld [vmem:[%s263 + $0x8] sm:$0x3]
        %v269 = vunpack.c.l.b16 %v194
        %v270 = vunpack.c.l.b16 %v195
        %v271 = vpack.c.b16 %v270, %v269
        %v273 = vunpack.c.l.b16 %v196
        %v274 = vpack.c.b16 %v273, %v273
        %vm275 = vsmask.f32 7424
        %v277 = vshrl.u32 %v271, 16
        %v279 = vshll.u32 %v271, 16
        %v281 = vrot.slane %v279, 1
        %v282 = vor.u32 %v277, %v281
        %v284 = vshll.u32 %v274, 16
        %v286 = vrot.slane %v284, 1
        %v287 = vsel %vm275, %v282, %v286
        %288 = vrot.lane.b32.xlu0 %v287, 16
        %v289 = vpop.permute.xlu0 %288
        %vm290 = vcmask 1046528
        %v291 = vrot.slane %v271, 1
        %v292 = vrot.slane %v274, 1
        %v293 = vsel %vm290, %v291, %v292
        %294 = vrot.lane.b32.xlu0 %v293, 32
        %v295 = vpop.permute.xlu0 %294
        %vm296 = vsmask.f32 6400
        %v297 = vrot.slane %v277, 1
        %v298 = vrot.slane %v279, 2
        %v299 = vor.u32 %v297, %v298
        %v300 = vshrl.u32 %v274, 16
        %v302 = vrot.slane %v300, 1
        %v303 = vrot.slane %v284, 2
        %v304 = vor.u32 %v302, %v303
        %v305 = vsel %vm296, %v299, %v304
        %306 = vrot.lane.b32.xlu0 %v305, 48
        %v307 = vpop.permute.xlu0 %306
        %v310 = vunpack.c.l.b16 %v201
        %v311 = vunpack.c.l.b16 %v202
        %v312 = vpack.c.b16 %v311, %v310
        %313 = vrot.lane.b32.xlu0 %v312, 64
        %v314 = vpop.permute.xlu0 %313
        %v316 = vunpack.c.l.b16 %v203
        %v317 = vpack.c.b16 %v316, %v316
        %v319 = vshrl.u32 %v312, 16
        %v321 = vshll.u32 %v312, 16
        %v323 = vrot.slane %v321, 1
        %v324 = vor.u32 %v319, %v323
        %v326 = vshll.u32 %v317, 16
        %v328 = vrot.slane %v326, 1
        %v329 = vsel %vm275, %v324, %v328
        %330 = vrot.lane.b32.xlu0 %v329, 80
        %v331 = vpop.permute.xlu0 %330
        %v332 = vrot.slane %v312, 1
        %v333 = vrot.slane %v317, 1
        %v334 = vsel %vm290, %v332, %v333
        %335 = vrot.lane.b32.xlu0 %v334, 96
        %v336 = vpop.permute.xlu0 %335
        %v337 = vrot.slane %v319, 1
        %v338 = vrot.slane %v321, 2
        %v339 = vor.u32 %v337, %v338
        %v340 = vshrl.u32 %v317, 16
        %v342 = vrot.slane %v340, 1
        %v343 = vrot.slane %v326, 2
        %v344 = vor.u32 %v342, %v343
        %v345 = vsel %vm296, %v339, %v344
        %346 = vrot.lane.b32.xlu0 %v345, 112
        %v347 = vpop.permute.xlu0 %346
        %v350 = vunpack.c.l.b16 %v208
        %v351 = vunpack.c.l.b16 %v209
        %v352 = vpack.c.b16 %v351, %v350
        %v354 = vunpack.c.l.b16 %v210
        %v355 = vpack.c.b16 %v354, %v354
        %v357 = vshrl.u32 %v352, 16
        %v359 = vshll.u32 %v352, 16
        %v361 = vrot.slane %v359, 1
        %v362 = vor.u32 %v357, %v361
        %v364 = vshll.u32 %v355, 16
        %v366 = vrot.slane %v364, 1
        %v367 = vsel %vm275, %v362, %v366
        %368 = vrot.lane.b32.xlu0 %v367, 16
        %v369 = vpop.permute.xlu0 %368
        %v370 = vrot.slane %v352, 1
        %v371 = vrot.slane %v355, 1
        %v372 = vsel %vm290, %v370, %v371
        %373 = vrot.lane.b32.xlu0 %v372, 32
        %v374 = vpop.permute.xlu0 %373
        %v375 = vrot.slane %v357, 1
        %v376 = vrot.slane %v359, 2
        %v377 = vor.u32 %v375, %v376
        %v378 = vshrl.u32 %v355, 16
        %v380 = vrot.slane %v378, 1
        %v381 = vrot.slane %v364, 2
        %v382 = vor.u32 %v380, %v381
        %v383 = vsel %vm296, %v377, %v382
        %384 = vrot.lane.b32.xlu0 %v383, 48
        %v385 = vpop.permute.xlu0 %384
        %v388 = vunpack.c.l.b16 %v215
        %v389 = vunpack.c.l.b16 %v216
        %v390 = vpack.c.b16 %v389, %v388
        %391 = vrot.lane.b32.xlu0 %v390, 64
        %v392 = vpop.permute.xlu0 %391
        %v394 = vunpack.c.l.b16 %v217
        %v395 = vpack.c.b16 %v394, %v394
        %v397 = vshrl.u32 %v390, 16
        %v399 = vshll.u32 %v390, 16
        %v401 = vrot.slane %v399, 1
        %v402 = vor.u32 %v397, %v401
        %v404 = vshll.u32 %v395, 16
        %v406 = vrot.slane %v404, 1
        %v407 = vsel %vm275, %v402, %v406
        %408 = vrot.lane.b32.xlu0 %v407, 80
        %v409 = vpop.permute.xlu0 %408
        %v410 = vrot.slane %v390, 1
        %v411 = vrot.slane %v395, 1
        %v412 = vsel %vm290, %v410, %v411
        %413 = vrot.lane.b32.xlu0 %v412, 96
        %v414 = vpop.permute.xlu0 %413
        %v415 = vrot.slane %v397, 1
        %v416 = vrot.slane %v399, 2
        %v417 = vor.u32 %v415, %v416
        %v418 = vshrl.u32 %v395, 16
        %v420 = vrot.slane %v418, 1
        %v421 = vrot.slane %v404, 2
        %v422 = vor.u32 %v420, %v421
        %v423 = vsel %vm296, %v417, %v422
        %424 = vrot.lane.b32.xlu0 %v423, 112
        %v425 = vpop.permute.xlu0 %424
        %vm426 = vcmask 130048
        %v428 = vsel %vm426, %v271, %v289
        %vm429 = vcmask 261120
        %v431 = vsel %vm429, %v428, %v295
        %vm432 = vcmask 392192
        %v434 = vsel %vm432, %v431, %v307
        %vm435 = vcmask 523264
        %v437 = vsel %vm435, %v434, %v314
        %vm438 = vcmask 654336
        %v440 = vsel %vm438, %v437, %v331
        %vm441 = vcmask 785408
        %v443 = vsel %vm441, %v440, %v336
        %vm444 = vcmask 916480
        %v446 = vsel %vm444, %v443, %v347
        %v449 = vsel %vm426, %v352, %v369
        %v451 = vsel %vm429, %v449, %v374
        %v453 = vsel %vm432, %v451, %v385
        %v455 = vsel %vm435, %v453, %v392
        %v457 = vsel %vm438, %v455, %v409
        %v459 = vsel %vm441, %v457, %v414
        %v461 = vsel %vm444, %v459, %v425
        %463 = vrot.lane.b32.xlu0 %v329, 16
        %v464 = vpop.permute.xlu0 %463
        %465 = vrot.lane.b32.xlu0 %v334, 32
        %v466 = vpop.permute.xlu0 %465
        %467 = vrot.lane.b32.xlu0 %v345, 48
        %v468 = vpop.permute.xlu0 %467
        %469 = vrot.lane.b32.xlu0 %v352, 64
        %v470 = vpop.permute.xlu0 %469
        %471 = vrot.lane.b32.xlu0 %v367, 80
        %v472 = vpop.permute.xlu0 %471
        %473 = vrot.lane.b32.xlu0 %v372, 96
        %v474 = vpop.permute.xlu0 %473
        %475 = vrot.lane.b32.xlu0 %v383, 112
        %v476 = vpop.permute.xlu0 %475
        %477 = vrot.lane.b32.xlu0 %v407, 16
        %v478 = vpop.permute.xlu0 %477
        %479 = vrot.lane.b32.xlu0 %v412, 32
        %v480 = vpop.permute.xlu0 %479
        %481 = vrot.lane.b32.xlu0 %v423, 48
        %v482 = vpop.permute.xlu0 %481
        %v485 = vunpack.c.l.b16 %v222
        %v486 = vunpack.c.l.b16 %v223
        %v487 = vpack.c.b16 %v486, %v485
        %488 = vrot.lane.b32.xlu0 %v487, 64
        %v489 = vpop.permute.xlu0 %488
        %v491 = vunpack.c.l.b16 %v224
        %v492 = vpack.c.b16 %v491, %v491
        %v494 = vshrl.u32 %v487, 16
        %v496 = vshll.u32 %v487, 16
        %v498 = vrot.slane %v496, 1
        %v499 = vor.u32 %v494, %v498
        %v501 = vshll.u32 %v492, 16
        %v503 = vrot.slane %v501, 1
        %v504 = vsel %vm275, %v499, %v503
        %505 = vrot.lane.b32.xlu0 %v504, 80
        %v506 = vpop.permute.xlu0 %505
        %v507 = vrot.slane %v487, 1
        %v508 = vrot.slane %v492, 1
        %v509 = vsel %vm290, %v507, %v508
        %510 = vrot.lane.b32.xlu0 %v509, 96
        %v511 = vpop.permute.xlu0 %510
        %v512 = vrot.slane %v494, 1
        %v513 = vrot.slane %v496, 2
        %v514 = vor.u32 %v512, %v513
        %v515 = vshrl.u32 %v492, 16
        %v517 = vrot.slane %v515, 1
        %v518 = vrot.slane %v501, 2
        %v519 = vor.u32 %v517, %v518
        %v520 = vsel %vm296, %v514, %v519
        %521 = vrot.lane.b32.xlu0 %v520, 112
        %v522 = vpop.permute.xlu0 %521
        %v524 = vsel %vm426, %v312, %v464
        %v526 = vsel %vm429, %v524, %v466
        %v528 = vsel %vm432, %v526, %v468
        %v530 = vsel %vm435, %v528, %v470
        %v532 = vsel %vm438, %v530, %v472
        %v534 = vsel %vm441, %v532, %v474
        %v536 = vsel %vm444, %v534, %v476
        %v539 = vsel %vm426, %v390, %v478
        %v541 = vsel %vm429, %v539, %v480
        %v543 = vsel %vm432, %v541, %v482
        %v545 = vsel %vm435, %v543, %v489
        %v547 = vsel %vm438, %v545, %v506
        %v549 = vsel %vm441, %v547, %v511
        %v551 = vsel %vm444, %v549, %v522
        %553 = vrot.lane.b32.xlu0 %v504, 16
        %v554 = vpop.permute.xlu0 %553
        %555 = vrot.lane.b32.xlu0 %v509, 32
        %v556 = vpop.permute.xlu0 %555
        %557 = vrot.lane.b32.xlu0 %v520, 48
        %v558 = vpop.permute.xlu0 %557
        %v561 = vunpack.c.l.b16 %v229
        %v562 = vunpack.c.l.b16 %v230
        %v563 = vpack.c.b16 %v562, %v561
        %564 = vrot.lane.b32.xlu0 %v563, 64
        %v565 = vpop.permute.xlu0 %564
        %v567 = vunpack.c.l.b16 %v231
        %v568 = vpack.c.b16 %v567, %v567
        %v570 = vshrl.u32 %v563, 16
        %v572 = vshll.u32 %v563, 16
        %v574 = vrot.slane %v572, 1
        %v575 = vor.u32 %v570, %v574
        %v577 = vshll.u32 %v568, 16
        %v579 = vrot.slane %v577, 1
        %v580 = vsel %vm275, %v575, %v579
        %581 = vrot.lane.b32.xlu0 %v580, 80
        %v582 = vpop.permute.xlu0 %581
        %v583 = vrot.slane %v563, 1
        %v584 = vrot.slane %v568, 1
        %v585 = vsel %vm290, %v583, %v584
        %586 = vrot.lane.b32.xlu0 %v585, 96
        %v587 = vpop.permute.xlu0 %586
        %v588 = vrot.slane %v570, 1
        %v589 = vrot.slane %v572, 2
        %v590 = vor.u32 %v588, %v589
        %v591 = vshrl.u32 %v568, 16
        %v593 = vrot.slane %v591, 1
        %v594 = vrot.slane %v577, 2
        %v595 = vor.u32 %v593, %v594
        %v596 = vsel %vm296, %v590, %v595
        %597 = vrot.lane.b32.xlu0 %v596, 112
        %v598 = vpop.permute.xlu0 %597
        %v600 = vsel %vm426, %v487, %v554
        %v602 = vsel %vm429, %v600, %v556
        %v604 = vsel %vm432, %v602, %v558
        %v606 = vsel %vm435, %v604, %v565
        %v608 = vsel %vm438, %v606, %v582
        %v610 = vsel %vm441, %v608, %v587
        %v612 = vsel %vm444, %v610, %v598
        %614 = vrot.lane.b32.xlu0 %v580, 16
        %v615 = vpop.permute.xlu0 %614
        %616 = vrot.lane.b32.xlu0 %v585, 32
        %v617 = vpop.permute.xlu0 %616
        %618 = vrot.lane.b32.xlu0 %v596, 48
        %v619 = vpop.permute.xlu0 %618
        %v622 = vunpack.c.l.b16 %v236
        %v623 = vunpack.c.l.b16 %v237
        %v624 = vpack.c.b16 %v623, %v622
        %625 = vrot.lane.b32.xlu0 %v624, 64
        %v626 = vpop.permute.xlu0 %625
        %v628 = vunpack.c.l.b16 %v238
        %v629 = vpack.c.b16 %v628, %v628
        %v631 = vshrl.u32 %v624, 16
        %v633 = vshll.u32 %v624, 16
        %v635 = vrot.slane %v633, 1
        %v636 = vor.u32 %v631, %v635
        %v638 = vshll.u32 %v629, 16
        %v640 = vrot.slane %v638, 1
        %v641 = vsel %vm275, %v636, %v640
        %642 = vrot.lane.b32.xlu0 %v641, 80
        %v643 = vpop.permute.xlu0 %642
        %v644 = vrot.slane %v624, 1
        %v645 = vrot.slane %v629, 1
        %v646 = vsel %vm290, %v644, %v645
        %647 = vrot.lane.b32.xlu0 %v646, 96
        %v648 = vpop.permute.xlu0 %647
        %v649 = vrot.slane %v631, 1
        %v650 = vrot.slane %v633, 2
        %v651 = vor.u32 %v649, %v650
        %v652 = vshrl.u32 %v629, 16
        %v654 = vrot.slane %v652, 1
        %v655 = vrot.slane %v638, 2
        %v656 = vor.u32 %v654, %v655
        %v657 = vsel %vm296, %v651, %v656
        %658 = vrot.lane.b32.xlu0 %v657, 112
        %v659 = vpop.permute.xlu0 %658
        %v661 = vsel %vm426, %v563, %v615
        %v663 = vsel %vm429, %v661, %v617
        %v665 = vsel %vm432, %v663, %v619
        %v667 = vsel %vm435, %v665, %v626
        %v669 = vsel %vm438, %v667, %v643
        %v671 = vsel %vm441, %v669, %v648
        %v673 = vsel %vm444, %v671, %v659
        %675 = vrot.lane.b32.xlu0 %v641, 16
        %v676 = vpop.permute.xlu0 %675
        %677 = vrot.lane.b32.xlu0 %v646, 32
        %v678 = vpop.permute.xlu0 %677
        %679 = vrot.lane.b32.xlu0 %v657, 48
        %v680 = vpop.permute.xlu0 %679
        %v683 = vunpack.c.l.b16 %v243
        %v684 = vunpack.c.l.b16 %v244
        %v685 = vpack.c.b16 %v684, %v683
        %686 = vrot.lane.b32.xlu0 %v685, 64
        %v687 = vpop.permute.xlu0 %686
        %v689 = vunpack.c.l.b16 %v245
        %v690 = vpack.c.b16 %v689, %v689
        %v692 = vshrl.u32 %v685, 16
        %v694 = vshll.u32 %v685, 16
        %v696 = vrot.slane %v694, 1
        %v697 = vor.u32 %v692, %v696
        %v699 = vshll.u32 %v690, 16
        %v701 = vrot.slane %v699, 1
        %v702 = vsel %vm275, %v697, %v701
        %703 = vrot.lane.b32.xlu0 %v702, 80
        %v704 = vpop.permute.xlu0 %703
        %v705 = vrot.slane %v685, 1
        %v706 = vrot.slane %v690, 1
        %v707 = vsel %vm290, %v705, %v706
        %708 = vrot.lane.b32.xlu0 %v707, 96
        %v709 = vpop.permute.xlu0 %708
        %v710 = vrot.slane %v692, 1
        %v711 = vrot.slane %v694, 2
        %v712 = vor.u32 %v710, %v711
        %v713 = vshrl.u32 %v690, 16
        %v715 = vrot.slane %v713, 1
        %v716 = vrot.slane %v699, 2
        %v717 = vor.u32 %v715, %v716
        %v718 = vsel %vm296, %v712, %v717
        %719 = vrot.lane.b32.xlu0 %v718, 112
        %v720 = vpop.permute.xlu0 %719
        %v722 = vsel %vm426, %v624, %v676
        %v724 = vsel %vm429, %v722, %v678
        %v726 = vsel %vm432, %v724, %v680
        %v728 = vsel %vm435, %v726, %v687
        %v730 = vsel %vm438, %v728, %v704
        %v732 = vsel %vm441, %v730, %v709
        %v734 = vsel %vm444, %v732, %v720
        %736 = vrot.lane.b32.xlu0 %v702, 16
        %v737 = vpop.permute.xlu0 %736
        %738 = vrot.lane.b32.xlu0 %v707, 32
        %v739 = vpop.permute.xlu0 %738
        %740 = vrot.lane.b32.xlu0 %v718, 48
        %v741 = vpop.permute.xlu0 %740
        %v744 = vunpack.c.l.b16 %v250
        %v745 = vunpack.c.l.b16 %v251
        %v746 = vpack.c.b16 %v745, %v744
        %747 = vrot.lane.b32.xlu0 %v746, 64
        %v748 = vpop.permute.xlu0 %747
        %v750 = vunpack.c.l.b16 %v252
        %v751 = vpack.c.b16 %v750, %v750
        %v753 = vshrl.u32 %v746, 16
        %v755 = vshll.u32 %v746, 16
        %v757 = vrot.slane %v755, 1
        %v758 = vor.u32 %v753, %v757
        %v760 = vshll.u32 %v751, 16
        %v762 = vrot.slane %v760, 1
        %v763 = vsel %vm275, %v758, %v762
        %764 = vrot.lane.b32.xlu0 %v763, 80
        %v765 = vpop.permute.xlu0 %764
        %v766 = vrot.slane %v746, 1
        %v767 = vrot.slane %v751, 1
        %v768 = vsel %vm290, %v766, %v767
        %769 = vrot.lane.b32.xlu0 %v768, 96
        %v770 = vpop.permute.xlu0 %769
        %v771 = vrot.slane %v753, 1
        %v772 = vrot.slane %v755, 2
        %v773 = vor.u32 %v771, %v772
        %v774 = vshrl.u32 %v751, 16
        %v776 = vrot.slane %v774, 1
        %v777 = vrot.slane %v760, 2
        %v778 = vor.u32 %v776, %v777
        %v779 = vsel %vm296, %v773, %v778
        %780 = vrot.lane.b32.xlu0 %v779, 112
        %v781 = vpop.permute.xlu0 %780
        %v783 = vsel %vm426, %v685, %v737
        %v785 = vsel %vm429, %v783, %v739
        %v787 = vsel %vm432, %v785, %v741
        %v789 = vsel %vm435, %v787, %v748
        %v791 = vsel %vm438, %v789, %v765
        %v793 = vsel %vm441, %v791, %v770
        %v795 = vsel %vm444, %v793, %v781
        %797 = vrot.lane.b32.xlu0 %v763, 16
        %v798 = vpop.permute.xlu0 %797
        %799 = vrot.lane.b32.xlu0 %v768, 32
        %v800 = vpop.permute.xlu0 %799
        %801 = vrot.lane.b32.xlu0 %v779, 48
        %v802 = vpop.permute.xlu0 %801
        %v805 = vunpack.c.l.b16 %v257
        %v806 = vunpack.c.l.b16 %v258
        %v807 = vpack.c.b16 %v806, %v805
        %808 = vrot.lane.b32.xlu0 %v807, 64
        %v809 = vpop.permute.xlu0 %808
        %v811 = vunpack.c.l.b16 %v259
        %v812 = vpack.c.b16 %v811, %v811
        %v814 = vshrl.u32 %v807, 16
        %v816 = vshll.u32 %v807, 16
        %v818 = vrot.slane %v816, 1
        %v819 = vor.u32 %v814, %v818
        %v821 = vshll.u32 %v812, 16
        %v823 = vrot.slane %v821, 1
        %v824 = vsel %vm275, %v819, %v823
        %825 = vrot.lane.b32.xlu0 %v824, 80
        %v826 = vpop.permute.xlu0 %825
        %v827 = vrot.slane %v807, 1
        %v828 = vrot.slane %v812, 1
        %v829 = vsel %vm290, %v827, %v828
        %830 = vrot.lane.b32.xlu0 %v829, 96
        %v831 = vpop.permute.xlu0 %830
        %v832 = vrot.slane %v814, 1
        %v833 = vrot.slane %v816, 2
        %v834 = vor.u32 %v832, %v833
        %v835 = vshrl.u32 %v812, 16
        %v837 = vrot.slane %v835, 1
        %v838 = vrot.slane %v821, 2
        %v839 = vor.u32 %v837, %v838
        %v840 = vsel %vm296, %v834, %v839
        %841 = vrot.lane.b32.xlu0 %v840, 112
        %v842 = vpop.permute.xlu0 %841
        %v844 = vsel %vm426, %v746, %v798
        %v846 = vsel %vm429, %v844, %v800
        %v848 = vsel %vm432, %v846, %v802
        %v850 = vsel %vm435, %v848, %v809
        %v852 = vsel %vm438, %v850, %v826
        %v854 = vsel %vm441, %v852, %v831
        %v856 = vsel %vm444, %v854, %v842
        %858 = vrot.lane.b32.xlu0 %v824, 16
        %v859 = vpop.permute.xlu0 %858
        %860 = vrot.lane.b32.xlu0 %v829, 32
        %v861 = vpop.permute.xlu0 %860
        %862 = vrot.lane.b32.xlu0 %v840, 48
        %v863 = vpop.permute.xlu0 %862
        %v866 = vunpack.c.l.b16 %v264
        %v867 = vunpack.c.l.b16 %v265
        %v868 = vpack.c.b16 %v867, %v866
        %869 = vrot.lane.b32.xlu0 %v868, 64
        %v870 = vpop.permute.xlu0 %869
        %v872 = vunpack.c.l.b16 %v266
        %v873 = vpack.c.b16 %v872, %v872
        %v875 = vshrl.u32 %v868, 16
        %v877 = vshll.u32 %v868, 16
        %v879 = vrot.slane %v877, 1
        %v880 = vor.u32 %v875, %v879
        %v882 = vshll.u32 %v873, 16
        %v884 = vrot.slane %v882, 1
        %v885 = vsel %vm275, %v880, %v884
        %886 = vrot.lane.b32.xlu0 %v885, 80
        %v887 = vpop.permute.xlu0 %886
        %v888 = vrot.slane %v868, 1
        %v889 = vrot.slane %v873, 1
        %v890 = vsel %vm290, %v888, %v889
        %891 = vrot.lane.b32.xlu0 %v890, 96
        %v892 = vpop.permute.xlu0 %891
        %v893 = vrot.slane %v875, 1
        %v894 = vrot.slane %v877, 2
        %v895 = vor.u32 %v893, %v894
        %v896 = vshrl.u32 %v873, 16
        %v898 = vrot.slane %v896, 1
        %v899 = vrot.slane %v882, 2
        %v900 = vor.u32 %v898, %v899
        %v901 = vsel %vm296, %v895, %v900
        %902 = vrot.lane.b32.xlu0 %v901, 112
        %v903 = vpop.permute.xlu0 %902
        %v905 = vsel %vm426, %v807, %v859
        %v907 = vsel %vm429, %v905, %v861
        %v909 = vsel %vm432, %v907, %v863
        %v911 = vsel %vm435, %v909, %v870
        %v913 = vsel %vm438, %v911, %v887
        %v915 = vsel %vm441, %v913, %v892
        %v917 = vsel %vm444, %v915, %v903
        %v919 = vld [vmem:[%s1] sm:$0xf]
        %v920 = vld [vmem:[%s1 + $0x4] sm:$0xf]
        %v921 = vld [vmem:[%s1 + $0x8] sm:$0xf]
        %v922 = vld [vmem:[%s1 + $0xc] sm:$0xf]
        %v923 = vld [vmem:[%s1 + $0x10] sm:$0xf]
        %v924 = vld [vmem:[%s1 + $0x14] sm:$0xf]
        %v925 = vld [vmem:[%s1 + $0x18] sm:$0xf]
        %v926 = vld [vmem:[%s1 + $0x1c] sm:$0xf]
        %v927 = vld [vmem:[%s1 + $0x20] sm:$0xf]
        %v928 = vld [vmem:[%s1 + $0x24] sm:$0xf]
        %v929 = vld [vmem:[%s1 + $0x28] sm:$0xf]
        %v930 = vld [vmem:[%s1 + $0x2c] sm:$0xf]
        %v931 = vld [vmem:[%s1 + $0x30] sm:$0xf]
        %v932 = vld [vmem:[%s1 + $0x34] sm:$0xf]
        %v933 = vld [vmem:[%s1 + $0x38] sm:$0xf]
        %v934 = vld [vmem:[%s1 + $0x3c] sm:$0xf]
        %v935 = vld [vmem:[%s1 + $0x40] sm:$0xf]
        %v936 = vld [vmem:[%s1 + $0x44] sm:$0xf]
        %v937 = vld [vmem:[%s1 + $0x48] sm:$0xf]
        %v938 = vld [vmem:[%s1 + $0x4c] sm:$0xf]
        %v939 = vld [vmem:[%s1 + $0x50] sm:$0xf]
        %v940 = vld [vmem:[%s1 + $0x54] sm:$0xf]
        %v941 = vld [vmem:[%s1 + $0x58] sm:$0xf]
        %v942 = vld [vmem:[%s1 + $0x5c] sm:$0xf]
        %v943 = vld [vmem:[%s1 + $0x60] sm:$0xf]
        %v944 = vld [vmem:[%s1 + $0x64] sm:$0xf]
        %v945 = vld [vmem:[%s1 + $0x68] sm:$0xf]
        %v946 = vld [vmem:[%s1 + $0x6c] sm:$0xf]
        %v947 = vld [vmem:[%s1 + $0x70] sm:$0xf]
        %v948 = vld [vmem:[%s1 + $0x74] sm:$0xf]
        %v949 = vld [vmem:[%s1 + $0x78] sm:$0xf]
        %v950 = vld [vmem:[%s1 + $0x7c] sm:$0xf]
        %v951 = vld [vmem:[%s2] sm:$0x1]
        %v953 = vperm.slane %v951, 0
        %v987 = vunpack.c.l.b16 %v919
        %v988 = vunpack.c.l.b16 %v920
        %v989 = vunpack.c.l.b16 %v921
        %v990 = vunpack.c.l.b16 %v922
        %v991 = vunpack.c.l.b16 %v923
        %v992 = vunpack.c.l.b16 %v924
        %v993 = vunpack.c.l.b16 %v925
        %v994 = vunpack.c.l.b16 %v926
        %v995 = vunpack.c.l.b16 %v927
        %v996 = vunpack.c.l.b16 %v928
        %v997 = vunpack.c.l.b16 %v929
        %v998 = vunpack.c.l.b16 %v930
        %v999 = vunpack.c.l.b16 %v931
        %v1000 = vunpack.c.l.b16 %v932
        %v1001 = vunpack.c.l.b16 %v933
        %v1002 = vunpack.c.l.b16 %v934
        %v1003 = vunpack.c.l.b16 %v935
        %v1004 = vunpack.c.l.b16 %v936
        %v1005 = vunpack.c.l.b16 %v937
        %v1006 = vunpack.c.l.b16 %v938
        %v1007 = vunpack.c.l.b16 %v939
        %v1008 = vunpack.c.l.b16 %v940
        %v1009 = vunpack.c.l.b16 %v941
        %v1010 = vunpack.c.l.b16 %v942
        %v1011 = vunpack.c.l.b16 %v943
        %v1012 = vunpack.c.l.b16 %v944
        %v1013 = vunpack.c.l.b16 %v945
        %v1014 = vunpack.c.l.b16 %v946
        %v1015 = vunpack.c.l.b16 %v947
        %v1016 = vunpack.c.l.b16 %v948
        %v1017 = vunpack.c.l.b16 %v949
        %v1018 = vunpack.c.l.b16 %v950
        %v1019 = vpack.c.b16 %v988, %v987
        %v1020 = vpack.c.b16 %v990, %v989
        %v1021 = vpack.c.b16 %v992, %v991
        %v1022 = vpack.c.b16 %v994, %v993
        %v1023 = vpack.c.b16 %v996, %v995
        %v1024 = vpack.c.b16 %v998, %v997
        %v1025 = vpack.c.b16 %v1000, %v999
        %v1026 = vpack.c.b16 %v1002, %v1001
        %v1027 = vpack.c.b16 %v1004, %v1003
        %v1028 = vpack.c.b16 %v1006, %v1005
        %v1029 = vpack.c.b16 %v1008, %v1007
        %v1030 = vpack.c.b16 %v1010, %v1009
        %v1031 = vpack.c.b16 %v1012, %v1011
        %v1032 = vpack.c.b16 %v1014, %v1013
        %v1033 = vpack.c.b16 %v1016, %v1015
        %v1034 = vpack.c.b16 %v1018, %v1017
        %1051 = vmatpush.bf16.msra.mxu0 %v1026
        %1052 = vmatpush.bf16.msra.mxu0 %v1025
        %1053 = vmatpush.bf16.msra.mxu0 %v1024
        %1054 = vmatpush.bf16.msra.mxu0 %v1023
        %1055 = vmatpush.bf16.msra.mxu0 %v1022
        %1056 = vmatpush.bf16.msra.mxu0 %v1021
        %1057 = vmatpush.bf16.msra.mxu0 %v1020
        %1058 = vmatpush.bf16.msra.mxu0 %v1019
        %1059 = vmatmul.bf16.gmra.mxu0 %v446
        %v1060 = vpop.f32.mrf.mxu0
        %v1061 = vadd.f32 %v953, %v1060
        %v1062 = vpop.f32.mrf.mxu0
        %v1063 = vadd.f32 %v953, %v1062
        %1064 = vmatmul.bf16.gmra.mxu0 %v536
        %v1065 = vpop.f32.mrf.mxu0
        %v1066 = vadd.f32 %v953, %v1065
        %v1067 = vpop.f32.mrf.mxu0
        %v1068 = vadd.f32 %v953, %v1067
        %1069 = vmatmul.bf16.gmra.mxu0 %v461
        %v1070 = vpop.f32.mrf.mxu0
        %v1071 = vadd.f32 %v953, %v1070
        %v1072 = vpop.f32.mrf.mxu0
        %v1073 = vadd.f32 %v953, %v1072
        %1074 = vmatmul.bf16.gmra.mxu0 %v551
        %v1075 = vpop.f32.mrf.mxu0
        %v1076 = vadd.f32 %v953, %v1075
        %v1077 = vpop.f32.mrf.mxu0
        %v1078 = vadd.f32 %v953, %v1077
        %1079 = vmatmul.bf16.gmra.mxu0 %v612
        %v1080 = vpop.f32.mrf.mxu0
        %v1081 = vadd.f32 %v953, %v1080
        %v1082 = vpop.f32.mrf.mxu0
        %v1083 = vadd.f32 %v953, %v1082
        %1084 = vmatmul.bf16.gmra.mxu0 %v673
        %v1085 = vpop.f32.mrf.mxu0
        %v1086 = vadd.f32 %v953, %v1085
        %v1087 = vpop.f32.mrf.mxu0
        %v1088 = vadd.f32 %v953, %v1087
        %1089 = vmatmul.bf16.gmra.mxu0 %v734
        %v1090 = vpop.f32.mrf.mxu0
        %v1091 = vadd.f32 %v953, %v1090
        %v1092 = vpop.f32.mrf.mxu0
        %v1093 = vadd.f32 %v953, %v1092
        %1094 = vmatmul.bf16.gmra.mxu0 %v795
        %v1095 = vpop.f32.mrf.mxu0
        %v1096 = vadd.f32 %v953, %v1095
        %v1097 = vpop.f32.mrf.mxu0
        %v1098 = vadd.f32 %v953, %v1097
        %1099 = vdwg.mxu0
        %1100 = vmatpush.bf16.msra.mxu0 %v1034
        %1101 = vmatpush.bf16.msra.mxu0 %v1033
        %1102 = vmatpush.bf16.msra.mxu0 %v1032
        %1103 = vmatpush.bf16.msra.mxu0 %v1031
        %1104 = vmatpush.bf16.msra.mxu0 %v1030
        %1105 = vmatpush.bf16.msra.mxu0 %v1029
        %1106 = vmatpush.bf16.msra.mxu0 %v1028
        %1107 = vmatpush.bf16.msra.mxu0 %v1027
        %1108 = vmatmul.bf16.gmra.mxu0 %v461
        %v1109 = vpop.f32.mrf.mxu0
        %v1110 = vadd.f32 %v1061, %v1109
        %v1111 = vpop.f32.mrf.mxu0
        %v1112 = vadd.f32 %v1063, %v1111
        %1113 = vmatmul.bf16.gmra.mxu0 %v551
        %v1114 = vpop.f32.mrf.mxu0
        %v1115 = vadd.f32 %v1066, %v1114
        %v1116 = vpop.f32.mrf.mxu0
        %v1117 = vadd.f32 %v1068, %v1116
        %1118 = vmatmul.bf16.gmra.mxu0 %v612
        %v1119 = vpop.f32.mrf.mxu0
        %v1120 = vadd.f32 %v1071, %v1119
        %v1121 = vpop.f32.mrf.mxu0
        %v1122 = vadd.f32 %v1073, %v1121
        %1123 = vmatmul.bf16.gmra.mxu0 %v673
        %v1124 = vpop.f32.mrf.mxu0
        %v1125 = vadd.f32 %v1076, %v1124
        %v1126 = vpop.f32.mrf.mxu0
        %v1127 = vadd.f32 %v1078, %v1126
        %1128 = vmatmul.bf16.gmra.mxu0 %v734
        %v1129 = vpop.f32.mrf.mxu0
        %v1130 = vadd.f32 %v1081, %v1129
        %v1131 = vpop.f32.mrf.mxu0
        %v1132 = vadd.f32 %v1083, %v1131
        %1133 = vmatmul.bf16.gmra.mxu0 %v795
        %v1134 = vpop.f32.mrf.mxu0
        %v1135 = vadd.f32 %v1086, %v1134
        %v1136 = vpop.f32.mrf.mxu0
        %v1137 = vadd.f32 %v1088, %v1136
        %1138 = vmatmul.bf16.gmra.mxu0 %v856
        %v1139 = vpop.f32.mrf.mxu0
        %v1140 = vadd.f32 %v1091, %v1139
        %v1141 = vpop.f32.mrf.mxu0
        %v1142 = vadd.f32 %v1093, %v1141
        %1143 = vmatmul.bf16.gmra.mxu0 %v917
        %v1144 = vpop.f32.mrf.mxu0
        %v1145 = vadd.f32 %v1096, %v1144
        %v1146 = vpop.f32.mrf.mxu0
        %v1147 = vadd.f32 %v1098, %v1146
        %1148 = vdwg.mxu0
        %v1149 = vmax.f32 %v1110, 0.0
        %v1150 = vmax.f32 %v1112, 0.0
        %v1151 = vmax.f32 %v1115, 0.0
        %v1152 = vmax.f32 %v1117, 0.0
        %v1153 = vmax.f32 %v1120, 0.0
        %v1154 = vmax.f32 %v1122, 0.0
        %v1155 = vmax.f32 %v1125, 0.0
        %v1156 = vmax.f32 %v1127, 0.0
        %v1157 = vmax.f32 %v1130, 0.0
        %v1158 = vmax.f32 %v1132, 0.0
        %v1159 = vmax.f32 %v1135, 0.0
        %v1160 = vmax.f32 %v1137, 0.0
        %v1161 = vmax.f32 %v1140, 0.0
        %v1162 = vmax.f32 %v1142, 0.0
        %v1163 = vmax.f32 %v1145, 0.0
        %v1164 = vmax.f32 %v1147, 0.0
        %vm1165 = vcmask 516096
        %1166 = vst.msk [vmem:[#allocation2] sm:$0x1] %vm1165, 0.0
        %1167 = vst.msk [vmem:[#allocation2 + $0x18] sm:$0x1] %vm1165, 0.0
        %1168 = vst.msk [vmem:[#allocation2 + $0x30] sm:$0x1] %vm1165, 0.0
        %1169 = vst.msk [vmem:[#allocation2 + $0x48] sm:$0x1] %vm1165, 0.0
        %1170 = vst.msk [vmem:[#allocation2 + $0x60] sm:$0x1] %vm1165, 0.0
        %1171 = vst.msk [vmem:[#allocation2 + $0x78] sm:$0x1] %vm1165, 0.0
        %1172 = vst.msk [vmem:[#allocation2 + $0x90] sm:$0x1] %vm1165, 0.0
        %1173 = vst.msk [vmem:[#allocation2 + $0xa8] sm:$0x1] %vm1165, 0.0
        %1174 = vst.msk [vmem:[#allocation2 + $0x1] sm:$0xff] %vm435, %v1149
        %1175 = vst.msk [vmem:[#allocation2 + $0x9] sm:$0xff] %vm435, %v1150
        %1176 = vst.msk [vmem:[#allocation2 + $0x19] sm:$0xff] %vm435, %v1151
        %1177 = vst.msk [vmem:[#allocation2 + $0x21] sm:$0xff] %vm435, %v1152
        %1178 = vst.msk [vmem:[#allocation2 + $0x31] sm:$0xff] %vm435, %v1153
        %1179 = vst.msk [vmem:[#allocation2 + $0x39] sm:$0xff] %vm435, %v1154
        %1180 = vst.msk [vmem:[#allocation2 + $0x49] sm:$0xff] %vm435, %v1155
        %1181 = vst.msk [vmem:[#allocation2 + $0x51] sm:$0xff] %vm435, %v1156
        %1182 = vst.msk [vmem:[#allocation2 + $0x61] sm:$0xff] %vm435, %v1157
        %1183 = vst.msk [vmem:[#allocation2 + $0x69] sm:$0xff] %vm435, %v1158
        %1184 = vst.msk [vmem:[#allocation2 + $0x79] sm:$0xff] %vm435, %v1159
        %1185 = vst.msk [vmem:[#allocation2 + $0x81] sm:$0xff] %vm435, %v1160
        %1186 = vst.msk [vmem:[#allocation2 + $0x91] sm:$0xff] %vm435, %v1161
        %1187 = vst.msk [vmem:[#allocation2 + $0x99] sm:$0xff] %vm435, %v1162
        %1188 = vst.msk [vmem:[#allocation2 + $0xa9] sm:$0xff] %vm435, %v1163
        %1189 = vst.msk [vmem:[#allocation2 + $0xb1] sm:$0xff] %vm435, %v1164
        %v1190 = vld [vmem:[#allocation2] ss:$2 sm:$0xff]
        %s1191 = scalar_lea.vmem [#allocation2], 24
        %v1192 = vld [vmem:[%s1191] ss:$2 sm:$0xff]
        %s1193 = scalar_lea.vmem [#allocation2], 48
        %v1194 = vld [vmem:[%s1193] ss:$2 sm:$0xff]
        %s1195 = scalar_lea.vmem [#allocation2], 72
        %v1196 = vld [vmem:[%s1195] ss:$2 sm:$0xff]
        %s1197 = scalar_lea.vmem [#allocation2], 96
        %v1198 = vld [vmem:[%s1197] ss:$2 sm:$0xff]
        %s1199 = scalar_lea.vmem [#allocation2], 120
        %v1200 = vld [vmem:[%s1199] ss:$2 sm:$0xff]
        %s1201 = scalar_lea.vmem [#allocation2], 144
        %v1202 = vld [vmem:[%s1201] ss:$2 sm:$0xff]
        %s1203 = scalar_lea.vmem [#allocation2], 168
        %v1204 = vld [vmem:[%s1203] ss:$2 sm:$0xff]
        %s1205 = scalar_lea.vmem [#allocation2], 1
        %v1206 = vld [vmem:[%s1205] ss:$2 sm:$0xff]
        %s1207 = scalar_lea.vmem [#allocation2], 25
        %v1208 = vld [vmem:[%s1207] ss:$2 sm:$0xff]
        %s1209 = scalar_lea.vmem [#allocation2], 49
        %v1210 = vld [vmem:[%s1209] ss:$2 sm:$0xff]
        %s1211 = scalar_lea.vmem [#allocation2], 73
        %v1212 = vld [vmem:[%s1211] ss:$2 sm:$0xff]
        %s1213 = scalar_lea.vmem [#allocation2], 97
        %v1214 = vld [vmem:[%s1213] ss:$2 sm:$0xff]
        %s1215 = scalar_lea.vmem [#allocation2], 121
        %v1216 = vld [vmem:[%s1215] ss:$2 sm:$0xff]
        %s1217 = scalar_lea.vmem [#allocation2], 145
        %v1218 = vld [vmem:[%s1217] ss:$2 sm:$0xff]
        %s1219 = scalar_lea.vmem [#allocation2], 169
        %v1220 = vld [vmem:[%s1219] ss:$2 sm:$0xff]
        %v1221 = vmax.f32 %v1190, %v1206
        %v1222 = vmax.f32 %v1192, %v1208
        %v1223 = vmax.f32 %v1194, %v1210
        %v1224 = vmax.f32 %v1196, %v1212
        %v1225 = vmax.f32 %v1198, %v1214
        %v1226 = vmax.f32 %v1200, %v1216
        %v1227 = vmax.f32 %v1202, %v1218
        %v1228 = vmax.f32 %v1204, %v1220
        %s1229 = scalar_lea.vmem [#allocation2], 2
        %v1230 = vld [vmem:[%s1229] ss:$2 sm:$0xff]
        %s1231 = scalar_lea.vmem [#allocation2], 26
        %v1232 = vld [vmem:[%s1231] ss:$2 sm:$0xff]
        %s1233 = scalar_lea.vmem [#allocation2], 50
        %v1234 = vld [vmem:[%s1233] ss:$2 sm:$0xff]
        %s1235 = scalar_lea.vmem [#allocation2], 74
        %v1236 = vld [vmem:[%s1235] ss:$2 sm:$0xff]
        %s1237 = scalar_lea.vmem [#allocation2], 98
        %v1238 = vld [vmem:[%s1237] ss:$2 sm:$0xff]
        %s1239 = scalar_lea.vmem [#allocation2], 122
        %v1240 = vld [vmem:[%s1239] ss:$2 sm:$0xff]
        %s1241 = scalar_lea.vmem [#allocation2], 146
        %v1242 = vld [vmem:[%s1241] ss:$2 sm:$0xff]
        %s1243 = scalar_lea.vmem [#allocation2], 170
        %v1244 = vld [vmem:[%s1243] ss:$2 sm:$0xff]
        %v1245 = vmax.f32 %v1221, %v1230
        %v1246 = vmax.f32 %v1222, %v1232
        %v1247 = vmax.f32 %v1223, %v1234
        %v1248 = vmax.f32 %v1224, %v1236
        %v1249 = vmax.f32 %v1225, %v1238
        %v1250 = vmax.f32 %v1226, %v1240
        %v1251 = vmax.f32 %v1227, %v1242
        %v1252 = vmax.f32 %v1228, %v1244
        %s1253 = scalar_lea.vmem [#allocation3], 8
        %1254 = vst.msk [vmem:[%s1253] sm:$0xff] %vm435, %v1245
        %1255 = vst.msk [vmem:[%s1253 + $0x8] sm:$0xff] %vm435, %v1246
        %1256 = vst.msk [vmem:[%s1253 + $0x10] sm:$0xff] %vm435, %v1247
        %1257 = vst.msk [vmem:[%s1253 + $0x18] sm:$0xff] %vm435, %v1248
        %1258 = vst.msk [vmem:[%s1253 + $0x20] sm:$0xff] %vm435, %v1249
        %1259 = vst.msk [vmem:[%s1253 + $0x28] sm:$0xff] %vm435, %v1250
        %1260 = vst.msk [vmem:[%s1253 + $0x30] sm:$0xff] %vm435, %v1251
        %1261 = vst.msk [vmem:[%s1253 + $0x38] sm:$0xff] %vm435, %v1252
        %v1262 = vld [vmem:[#allocation3] sm:$0xff]
        %v1263 = vld [vmem:[#allocation3 + $0x10] sm:$0xff]
        %v1264 = vld [vmem:[#allocation3 + $0x20] sm:$0xff]
        %v1265 = vld [vmem:[#allocation3 + $0x30] sm:$0xff]
        %v1266 = vld [vmem:[%s1253] sm:$0xff]
        %v1267 = vld [vmem:[%s1253 + $0x10] sm:$0xff]
        %v1268 = vld [vmem:[%s1253 + $0x20] sm:$0xff]
        %v1269 = vld [vmem:[%s1253 + $0x30] sm:$0xff]
        %v1270 = vmax.f32 %v1262, %v1266
        %v1271 = vmax.f32 %v1263, %v1267
        %v1272 = vmax.f32 %v1264, %v1268
        %v1273 = vmax.f32 %v1265, %v1269
        %s1274 = scalar_lea.vmem [#allocation3], 16
        %v1275 = vld [vmem:[%s1274] sm:$0xff]
        %v1276 = vld [vmem:[%s1274 + $0x10] sm:$0xff]
        %v1277 = vld [vmem:[%s1274 + $0x20] sm:$0xff]
        %v1278 = vld [vmem:[%s1274 + $0x30] sm:$0xff]
        %v1279 = vmax.f32 %v1270, %v1275
        %v1280 = vmax.f32 %v1271, %v1276
        %v1281 = vmax.f32 %v1272, %v1277
        %v1282 = vmax.f32 %v1273, %v1278
        %1283 = vst.msk [vmem:[%s177] sm:$0xff] %vm435, %v1279
        %1284 = vst.msk [vmem:[%s177 + $0x8] sm:$0xff] %vm435, %v1280
        %1285 = vst.msk [vmem:[%s177 + $0x10] sm:$0xff] %vm435, %v1281
        %1286 = vst.msk [vmem:[%s177 + $0x18] sm:$0xff] %vm435, %v1282
        %s1287 = scalar_lea.vmem [#allocation3], 64
        %v1288 = vld [vmem:[%s1287] sm:$0xff]
        %1289 = vst.msk [vmem:[#allocation3] sm:$0xff] %vm435, %v1288
        %s1290 = sand.u32 %s107, 1
        %s1291 = scalar_lea.sflag [#allocation5], %s1290
        %s1292 = sand.u32 %s107, 1
        %s1293 = smul.addr %s1292, 32
        %s1294 = scalar_lea.vmem [#allocation4], %s1293
        // Predicated region
        $region37: #{stem_forward.1} parent=31 // pred_check
          %p1295 = pneg %p117
        $region38: #{stem_forward.1} parent=31 // pred_check_branch
          %1297 = sbr.rel (%p1295) target = $region40
        $region39: #{stem_forward.1} parent=31 // pred_region
          %s1298 = smul.u32 4, %s22
          %1300 = vsyncadd %s1291, 0
          %s1301 = smul.addr %s21, 8
          %s1302 = sadd.s32 %s1298, %s1301
          %s1303 = smul.addr %s1302, 8
          %s1304 = scalar_lea.hbm %s3, %s1303
          %s1305 = sshll.u32 %s1294, 4
          %s1306 = int_to_ptr.vmem [resolvable:$true] %s1305
          %s1307 = sshll.u32 %s1304, 4
          %s1308 = int_to_ptr.hbm [resolvable:$true] %s1307
          %1313 = dma.vmem_to_hbm [thread:$0]  %s1306, 512, %s1308, %s1291, 128, 128, 8
        $region40: #{stem_forward.1} parent=31 // pred_fallthru
          _
      $region32: #{stem_forward.1} parent=5 // pred_fallthru
        _
      %p1314 = scmp.le.s32.totalorder 2, %s12
      // Predicated region
      $region41: #{stem_forward.1} parent=5 // pred_check
        %p1315 = pneg %p1314
      $region42: #{stem_forward.1} parent=5 // pred_check_branch
        %1317 = sbr.rel (%p1315) target = $region44
      $region43: #{stem_forward.1} parent=5 // pred_region
        %s1318 = ssub.s32 %s12, 2
        // Predicated region
        $region45: #{stem_forward.1} parent=43 // pred_check
          %p1319 = pneg %p123
        $region46: #{stem_forward.1} parent=43 // pred_check_branch
          %1321 = sbr.rel (%p1319) target = $region48
        $region47: #{stem_forward.1} parent=43 // pred_region
          %s1322 = sand.u32 %s108, 1
          %s1323 = scalar_lea.sflag [#allocation5], %s1322
          %s1324 = sand.u32 %s108, 1
          %s1325 = smul.addr %s1324, 32
          %s1326 = scalar_lea.vmem [#allocation4], %s1325
          %1328 = dma.done %s1323, 512
        $region48: #{stem_forward.1} parent=43 // pred_fallthru
          _
      $region44: #{stem_forward.1} parent=5 // pred_fallthru
        _
    $region6: #{stem_forward.1} parent=1 // loop_footer
      %s16 = sadd.s32 1, %s12
    $region7: #{stem_forward.1} parent=1 // loop_footer_branch
      %11 = sbr.rel target = $region3
    $region8: #{stem_forward.1} parent=1 // loop_exit
      _
    %1329 = vsyncpa [#allocation5], 1
    %s1330 = scalar_lea.sflag [#allocation5], 1
    %1331 = vsyncpa %s1330, 1

</llo_original>
